<compile_context>
chip_gen: v7x
topology: tpu7x:2x2x1
jax: 0.10.0
libtpu: 0.0.40
codegen_flags: <defaults>
</compile_context>

<pallas_src>
import functools

import jax
import jax.numpy as jnp
from jax.experimental import pallas as pl
from jax.experimental.pallas import tpu as pltpu

_LEAKY_SLOPE = 0.3
_BN_EPS = 1e-5
_LANE = 128
_SUBLANE = 8


# ---------------------------------------------------------------------------
# signatory.logsignature_channels(channels, depth) == number of Lyndon words of
# length 1..depth over an alphabet of `channels` letters (Witt formula).
# ---------------------------------------------------------------------------
def _mobius(n):
    if n == 1:
        return 1
    result, m, p = 1, n, 2
    while p * p <= m:
        if m % p == 0:
            m //= p
            if m % p == 0:
                return 0
            result = -result
        p += 1
    if m > 1:
        result = -result
    return result


def logsignature_channels(channels, depth):
    total = 0
    for k in range(1, depth + 1):
        s = 0
        for d in range(1, k + 1):
            if k % d == 0:
                s += _mobius(d) * channels ** (k // d)
        total += s // k
    return total


def _round_up(x, m):
    return (x + m - 1) // m * m


def _leaky(x, slope):
    return jnp.where(x > 0, x, slope * x)


# ---------------------------------------------------------------------------
# Fast path: the ENTIRE forward in one kernel (whole batch resident in VMEM).
# Both BatchNorms use exact full-batch statistics computed in-kernel, so there
# are no intermediate HBM round-trips and only one dispatch.
# ---------------------------------------------------------------------------
def _fused_kernel(bm_ref, z_ref, w1bm_ref, w1z_ref, b1_ref, w2_ref, b2_ref,
                  g2_ref, be2_ref, w3_ref, b3_ref, g3_ref, be3_ref,
                  out_ref, *, batch, mask_rows, slope):
    bf16 = jnp.bfloat16
    a1 = (jnp.dot(bm_ref[...].astype(bf16), w1bm_ref[...],
                  preferred_element_type=jnp.float32)
          + jnp.dot(z_ref[...].astype(bf16), w1z_ref[...],
                    preferred_element_type=jnp.float32)
          + b1_ref[...])
    h1 = _leaky(a1, slope)                                   # f32 on the VPU
    a2 = jnp.dot(h1.astype(bf16), w2_ref[...],
                 preferred_element_type=jnp.float32) + b2_ref[...]

    bp = a2.shape[0]
    inv_n = 1.0 / batch
    if mask_rows:
        row_ok = jax.lax.broadcasted_iota(jnp.int32, (bp, 1), 0) < batch
        mask = lambda x: jnp.where(row_ok, x, 0.0)
    else:
        mask = lambda x: x

    # Exact train-mode BatchNorm over the full batch (biased variance, single pass).
    a2m = mask(a2)
    mean2 = jnp.sum(a2m, axis=0, keepdims=True) * inv_n
    var2 = jnp.maximum(jnp.sum(a2m * a2m, axis=0, keepdims=True) * inv_n
                       - mean2 * mean2, 0.0)
    sc2 = g2_ref[...] * jax.lax.rsqrt(var2 + _BN_EPS)        # rsqrt -> EUP slot
    sh2 = be2_ref[...] - mean2 * sc2
    h2 = _leaky(a2 * sc2 + sh2, slope)

    a3 = jnp.dot(h2.astype(bf16), w3_ref[...],
                 preferred_element_type=jnp.float32) + b3_ref[...]
    a3m = mask(a3)
    mean3 = jnp.sum(a3m, axis=0, keepdims=True) * inv_n
    var3 = jnp.maximum(jnp.sum(a3m * a3m, axis=0, keepdims=True) * inv_n
                       - mean3 * mean3, 0.0)
    sc3 = g3_ref[...] * jax.lax.rsqrt(var3 + _BN_EPS)
    sh3 = be3_ref[...] - mean3 * sc3

    # W3/b3/gamma3/beta3 have `path_dim` leading zero columns, so gen already sits
    # in lanes [path_dim, path_dim+out_dim): cat([bm, gen]) == one lane-dense add.
    out_ref[...] = bm_ref[...] + (a3 * sc3 + sh3)


# ---------------------------------------------------------------------------
# Large-batch fallback, stage 1:
#   h1 = LeakyReLU(cat([bm, z]) @ W1 + b1);  a2 = h1 @ W2 + b2
# The input concat is folded into two matmuls (bm @ W1[:P] + z @ W1[P:]).
# Emits per-tile partial (sum, sum^2) of a2 so BN statistics stay exact under
# batch tiling.
# ---------------------------------------------------------------------------
def _stage1_kernel(bm_ref, z_ref, w1bm_ref, w1z_ref, b1_ref, w2_ref, b2_ref,
                   a2_ref, st_ref, *, tile_b, batch, slope):
    bf16 = jnp.bfloat16
    a1 = (jnp.dot(bm_ref[...].astype(bf16), w1bm_ref[...],
                  preferred_element_type=jnp.float32)
          + jnp.dot(z_ref[...].astype(bf16), w1z_ref[...],
                    preferred_element_type=jnp.float32)
          + b1_ref[...])
    h1 = _leaky(a1, slope)
    a2 = jnp.dot(h1.astype(bf16), w2_ref[...],
                 preferred_element_type=jnp.float32) + b2_ref[...]
    a2_ref[...] = a2

    # Single-pass partial stats; mask zero-padded batch rows of the last tile.
    row = (jax.lax.broadcasted_iota(jnp.int32, (tile_b, 1), 0)
           + pl.program_id(0) * tile_b)
    a2m = jnp.where(row < batch, a2, 0.0)
    st_ref[0:1, :] = jnp.sum(a2m, axis=0, keepdims=True)
    st_ref[1:2, :] = jnp.sum(a2m * a2m, axis=0, keepdims=True)
    # rows 2..7 of the 8-row stats block are never read downstream.


# ---------------------------------------------------------------------------
# Large-batch fallback, stage 2:
#   h2 = LeakyReLU(a2 * scale2 + shift2)   (folded BatchNorm)
#   a3 = h2 @ W3 + b3, plus partial (sum, sum^2) of a3 for the final BN.
# ---------------------------------------------------------------------------
def _stage2_kernel(a2_ref, sc2_ref, sh2_ref, w3_ref, b3_ref,
                   a3_ref, st_ref, *, tile_b, batch, slope):
    h2 = _leaky(a2_ref[...] * sc2_ref[...] + sh2_ref[...], slope)
    a3 = jnp.dot(h2.astype(jnp.bfloat16), w3_ref[...],
                 preferred_element_type=jnp.float32) + b3_ref[...]
    a3_ref[...] = a3

    row = (jax.lax.broadcasted_iota(jnp.int32, (tile_b, 1), 0)
           + pl.program_id(0) * tile_b)
    a3m = jnp.where(row < batch, a3, 0.0)
    st_ref[0:1, :] = jnp.sum(a3m, axis=0, keepdims=True)
    st_ref[1:2, :] = jnp.sum(a3m * a3m, axis=0, keepdims=True)


def _fold_batchnorm(stats, n_tiles, batch, gamma, beta):
    """Reduce per-tile (sum, sum^2) partials and fold train-mode BatchNorm1d into a
    per-feature scale/shift so the consumer applies y = x*scale + shift."""
    width = stats.shape[-1]
    stats = stats.reshape(n_tiles, _SUBLANE, width)
    total = jnp.sum(stats[:, 0, :], axis=0)
    total_sq = jnp.sum(stats[:, 1, :], axis=0)
    mean = (total / batch)[None, :]
    var = jnp.maximum(total_sq[None, :] / batch - mean * mean, 0.0)  # biased
    scale = gamma * jax.lax.rsqrt(var + _BN_EPS)
    shift = beta - mean * scale
    return scale, shift


@functools.partial(jax.jit, static_argnames=("path_dim", "out_dim", "tile_batch",
                                             "fused_batch_limit"))
def conditional_logsig_forward(bm, z, params, *, path_dim, out_dim,
                               tile_batch=512, fused_batch_limit=2048):
    """Forward pass of Conditional_Logsig_Generator: returns cat([bm, gen_logsig], -1)."""
    f32 = jnp.float32
    batch = bm.shape[0]
    zdim = z.shape[-1]
    hp = params["b1"].shape[-1]        # padded hidden width (multiple of 128)
    op = params["b3"].shape[-1]        # padded output-slab width (multiple of 128)

    vmem_cap = pltpu.CompilerParams(vmem_limit_bytes=32 * 1024 * 1024)

    # ----------------------- fused single-kernel fast path -----------------------
    bp = _round_up(batch, _SUBLANE)
    if bp <= fused_batch_limit:
        bm_pad = jnp.pad(bm.astype(f32), ((0, bp - batch), (0, op - path_dim)))
        z_pad = jnp.pad(z.astype(f32), ((0, bp - batch), (0, 0)))
        out_pad = pl.pallas_call(
            functools.partial(_fused_kernel, batch=batch,
                              mask_rows=(bp != batch), slope=_LEAKY_SLOPE),
            out_shape=jax.ShapeDtypeStruct((bp, op), f32),
            compiler_params=vmem_cap,
        )(bm_pad, z_pad, params["w1bm"], params["w1z"], params["b1"],
          params["w2"], params["b2"], params["gamma2"], params["beta2"],
          params["w3"], params["b3"], params["gamma3"], params["beta3"])
        return out_pad[:batch, :path_dim + out_dim]

    # ------------------------- tiled large-batch fallback ------------------------
    # Independent batch tiles -> "parallel"; BN exactness via per-tile partial stats.
    tile_b = max(_SUBLANE, min(tile_batch, bp))
    n_tiles = pl.cdiv(batch, tile_b)
    batch_pad = n_tiles * tile_b

    bm_pad = jnp.pad(bm.astype(f32), ((0, batch_pad - batch), (0, op - path_dim)))
    z_pad = jnp.pad(z.astype(f32), ((0, batch_pad - batch), (0, 0)))

    cparams = pltpu.CompilerParams(
        dimension_semantics=("parallel",),      # shard batch tiles across v7x's 2 TCs
        vmem_limit_bytes=32 * 1024 * 1024,
    )

    def tiled(cols):
        return pl.BlockSpec((tile_b, cols), lambda t: (t, 0))

    def resident(shape):
        return pl.BlockSpec(shape, lambda t: (0,) * len(shape))

    def stats_spec(cols):
        return pl.BlockSpec((_SUBLANE, cols), lambda t: (t, 0))

    # ------------------------------- stage 1 -------------------------------
    a2, st2 = pl.pallas_call(
        functools.partial(_stage1_kernel, tile_b=tile_b, batch=batch,
                          slope=_LEAKY_SLOPE),
        grid=(n_tiles,),
        in_specs=[tiled(op), tiled(zdim),
                  resident((op, hp)), resident((zdim, hp)), resident((1, hp)),
                  resident((hp, hp)), resident((1, hp))],
        out_specs=[tiled(hp), stats_spec(hp)],
        out_shape=[jax.ShapeDtypeStruct((batch_pad, hp), f32),
                   jax.ShapeDtypeStruct((n_tiles * _SUBLANE, hp), f32)],
        compiler_params=cparams,
    )(bm_pad, z_pad, params["w1bm"], params["w1z"], params["b1"],
      params["w2"], params["b2"])

    scale2, shift2 = _fold_batchnorm(st2, n_tiles, batch,
                                     params["gamma2"], params["beta2"])

    # ------------------------------- stage 2 -------------------------------
    a3, st3 = pl.pallas_call(
        functools.partial(_stage2_kernel, tile_b=tile_b, batch=batch,
                          slope=_LEAKY_SLOPE),
        grid=(n_tiles,),
        in_specs=[tiled(hp), resident((1, hp)), resident((1, hp)),
                  resident((hp, op)), resident((1, op))],
        out_specs=[tiled(op), stats_spec(op)],
        out_shape=[jax.ShapeDtypeStruct((batch_pad, op), f32),
                   jax.ShapeDtypeStruct((n_tiles * _SUBLANE, op), f32)],
        compiler_params=cparams,
    )(a2, scale2, shift2, params["w3"], params["b3"])

    scale3, shift3 = _fold_batchnorm(st3, n_tiles, batch,
                                     params["gamma3"], params["beta3"])

    # Final BN fold + cat([bm, gen]) is a single fused XLA elementwise op over the
    # lane-dense [B, op] slab (gen already occupies lanes [path_dim, path_dim+out_dim)
    # via the zero-padded W3/b3 columns), so a third pallas_call isn't worth its
    # fixed dispatch cost or the extra bm/a3 pipeline pass.
    out_pad = bm_pad + a3 * scale3 + shift3
    return out_pad[:batch, :path_dim + out_dim]


def init_params(key, input_dim, hidden_dim, path_dim, logsig_level):
    """Every parameter ~ N(0,1), matching `nn.init.normal_(param)` in __init__
    (this includes the BatchNorm affine weights/biases). Returns
    (kernel_params, reference_params, out_dim): kernel_params are lane-padded,
    bf16-weight tensors laid out for the kernels; reference_params are raw f32."""
    out_dim = (logsignature_channels(path_dim, logsig_level)
               - logsignature_channels(path_dim, logsig_level - 1))
    in_dim = path_dim + input_dim
    ks = jax.random.split(key, 10)
    # PyTorch Linear stores weight as [out, in]; we generate directly as [in, out].
    w1 = jax.random.normal(ks[0], (in_dim, hidden_dim), jnp.float32)
    b1 = jax.random.normal(ks[1], (1, hidden_dim), jnp.float32)
    w2 = jax.random.normal(ks[2], (hidden_dim, hidden_dim), jnp.float32)
    b2 = jax.random.normal(ks[3], (1, hidden_dim), jnp.float32)
    g2 = jax.random.normal(ks[4], (1, hidden_dim), jnp.float32)
    be2 = jax.random.normal(ks[5], (1, hidden_dim), jnp.float32)
    w3 = jax.random.normal(ks[6], (hidden_dim, out_dim), jnp.float32)
    b3 = jax.random.normal(ks[7], (1, out_dim), jnp.float32)
    g3 = jax.random.normal(ks[8], (1, out_dim), jnp.float32)
    be3 = jax.random.normal(ks[9], (1, out_dim), jnp.float32)
    ref_params = dict(w1=w1, b1=b1, w2=w2, b2=b2, gamma2=g2, beta2=be2,
                      w3=w3, b3=b3, gamma3=g3, beta3=be3)

    hp = _round_up(hidden_dim, _LANE)             # padded hidden width
    op = _round_up(path_dim + out_dim, _LANE)     # padded output-slab width
    hpad = hp - hidden_dim
    # Output-layer params get `path_dim` leading zero columns so the generated
    # log-signature lands directly in lanes [path_dim, path_dim+out_dim).
    ocols = (path_dim, op - path_dim - out_dim)
    bf16 = jnp.bfloat16
    kernel_params = dict(
        w1bm=jnp.pad(w1[:path_dim], ((0, op - path_dim), (0, hpad))).astype(bf16),
        w1z=jnp.pad(w1[path_dim:], ((0, 0), (0, hpad))).astype(bf16),
        b1=jnp.pad(b1, ((0, 0), (0, hpad))),
        w2=jnp.pad(w2, ((0, hpad), (0, hpad))).astype(bf16),
        b2=jnp.pad(b2, ((0, 0), (0, hpad))),
        gamma2=jnp.pad(g2, ((0, 0), (0, hpad))),
        beta2=jnp.pad(be2, ((0, 0), (0, hpad))),
        w3=jnp.pad(w3, ((0, hpad), ocols)).astype(bf16),
        b3=jnp.pad(b3, ((0, 0), ocols)),
        gamma3=jnp.pad(g3, ((0, 0), ocols)),
        beta3=jnp.pad(be3, ((0, 0), ocols)),
    )
    return kernel_params, ref_params, out_dim


def reference_forward(bm, z, ref_params, *, bf16_matmul):
    """Plain-JAX reference. bf16_matmul=True mirrors the kernel precision policy
    (bf16 MXU inputs, f32 accumulation/elementwise); False is strict f32 math."""
    cast = (lambda a: a.astype(jnp.bfloat16)) if bf16_matmul else (lambda a: a)

    def dot(x, w):
        return jnp.dot(cast(x), cast(w), preferred_element_type=jnp.float32)

    def batchnorm(x, gamma, beta):
        mean = jnp.mean(x, axis=0, keepdims=True)
        var = jnp.maximum(jnp.mean(x * x, axis=0, keepdims=True) - mean * mean, 0.0)
        return (x - mean) * jax.lax.rsqrt(var + _BN_EPS) * gamma + beta

    x = jnp.concatenate([bm, z], axis=-1)
    h1 = _leaky(dot(x, ref_params["w1"]) + ref_params["b1"], _LEAKY_SLOPE)
    h2 = _leaky(batchnorm(dot(h1, ref_params["w2"]) + ref_params["b2"],
                          ref_params["gamma2"], ref_params["beta2"]), _LEAKY_SLOPE)
    gen = batchnorm(dot(h2, ref_params["w3"]) + ref_params["b3"],
                    ref_params["gamma3"], ref_params["beta3"])
    return jnp.concatenate([bm, gen], axis=-1)


if __name__ == "__main__":
    # Small but representative shapes: hidden is a multiple of 128; the 203-row batch
    # is not a multiple of 8 (exercises row masking in the fused kernel) and spans two
    # 128-row tiles in the fallback path (exercises cross-tile BatchNorm reduction).
    batch, input_dim, hidden_dim = 203, 16, 128
    path_dim, logsig_level = 3, 3       # generated logsig channels = 14 - 6 = 8

    key = jax.random.PRNGKey(0)
    k_bm, k_z, k_p = jax.random.split(key, 3)
    params, ref_params, out_dim = init_params(k_p, input_dim, hidden_dim,
                                              path_dim, logsig_level)
    bm = jax.random.normal(k_bm, (batch, path_dim), jnp.float32)
    z = jax.random.normal(k_z, (batch, input_dim), jnp.float32)

    # Fused single-kernel path (default for moderate batches).
    out = conditional_logsig_forward(bm, z, params, path_dim=path_dim,
                                     out_dim=out_dim)
    out = jax.block_until_ready(out)
    assert out.shape == (batch, path_dim + out_dim)

    # Tiled large-batch fallback, forced, with 2 batch tiles.
    out_tiled = conditional_logsig_forward(bm, z, params, path_dim=path_dim,
                                           out_dim=out_dim, tile_batch=128,
                                           fused_batch_limit=0)
    out_tiled = jax.block_until_ready(out_tiled)
    assert out_tiled.shape == (batch, path_dim + out_dim)

    # bm must pass straight through to the first path_dim output channels.
    assert jnp.array_equal(out[:, :path_dim], bm)
    assert jnp.array_equal(out_tiled[:, :path_dim], bm)

    # Both paths compute the same math (modulo f32 summation order).
    assert jnp.allclose(out, out_tiled, atol=1e-3, rtol=1e-3)

    # Tight check vs a reference that mirrors the kernel's bf16-MXU / f32 policy.
    ref_mirror = reference_forward(bm, z, ref_params, bf16_matmul=True)
    assert jnp.allclose(out, ref_mirror, atol=5e-3, rtol=5e-3)
    assert jnp.allclose(out_tiled, ref_mirror, atol=5e-3, rtol=5e-3)

    # Loose check vs strict f32 math (deviation comes only from bf16 MXU inputs).
    ref_f32 = reference_forward(bm, z, ref_params, bf16_matmul=False)
    assert jnp.allclose(out, ref_f32, atol=2e-1, rtol=2e-1)

    print("KERNEL_OK")
</pallas_src>

<mosaic_0001>
module attributes {stable_mosaic.version = 11 : i64} {
  func.func @_fused_kernel(%arg0: memref<208x128xf32, #tpu.memory_space<vmem>>, %arg1: memref<208x16xf32, #tpu.memory_space<vmem>>, %arg2: memref<128x128xbf16, #tpu.memory_space<vmem>>, %arg3: memref<16x128xbf16, #tpu.memory_space<vmem>>, %arg4: memref<1x128xf32, #tpu.memory_space<vmem>>, %arg5: memref<128x128xbf16, #tpu.memory_space<vmem>>, %arg6: memref<1x128xf32, #tpu.memory_space<vmem>>, %arg7: memref<1x128xf32, #tpu.memory_space<vmem>>, %arg8: memref<1x128xf32, #tpu.memory_space<vmem>>, %arg9: memref<128x128xbf16, #tpu.memory_space<vmem>>, %arg10: memref<1x128xf32, #tpu.memory_space<vmem>>, %arg11: memref<1x128xf32, #tpu.memory_space<vmem>>, %arg12: memref<1x128xf32, #tpu.memory_space<vmem>>, %arg13: memref<208x128xf32, #tpu.memory_space<vmem>>) attributes {dimension_semantics = [], scalar_prefetch = 0 : i64, scratch_operands = 0 : i64, tpu.core_type = #tpu.core_type<tc>} {
    %c0 = arith.constant 0 : index
    %c0_0 = arith.constant 0 : index
    %0 = vector.load %arg0[%c0, %c0_0] : memref<208x128xf32, #tpu.memory_space<vmem>>, vector<208x128xf32>
    %1 = arith.truncf %0 : vector<208x128xf32> to vector<208x128xbf16>
    %c0_1 = arith.constant 0 : index
    %c0_2 = arith.constant 0 : index
    %2 = vector.load %arg2[%c0_1, %c0_2] : memref<128x128xbf16, #tpu.memory_space<vmem>>, vector<128x128xbf16>
    %cst = arith.constant dense<0.000000e+00> : vector<208x128xf32>
    %3 = tpu.matmul %1, %2, %cst {dimension_numbers = #tpu.dot_dimension_numbers<[1], [0], [0], [1], [0, 0, 1, 1], [], []>} : vector<208x128xbf16>, vector<128x128xbf16>, vector<208x128xf32> -> vector<208x128xf32>
    %c0_3 = arith.constant 0 : index
    %c0_4 = arith.constant 0 : index
    %4 = vector.load %arg1[%c0_3, %c0_4] : memref<208x16xf32, #tpu.memory_space<vmem>>, vector<208x16xf32>
    %5 = arith.truncf %4 : vector<208x16xf32> to vector<208x16xbf16>
    %c0_5 = arith.constant 0 : index
    %c0_6 = arith.constant 0 : index
    %6 = vector.load %arg3[%c0_5, %c0_6] : memref<16x128xbf16, #tpu.memory_space<vmem>>, vector<16x128xbf16>
    %cst_7 = arith.constant dense<0.000000e+00> : vector<208x128xf32>
    %7 = tpu.matmul %5, %6, %cst_7 {dimension_numbers = #tpu.dot_dimension_numbers<[1], [0], [0], [1], [0, 0, 1, 1], [], []>} : vector<208x16xbf16>, vector<16x128xbf16>, vector<208x128xf32> -> vector<208x128xf32>
    %8 = arith.addf %3, %7 : vector<208x128xf32>
    %c0_8 = arith.constant 0 : index
    %c0_9 = arith.constant 0 : index
    %9 = vector.load %arg4[%c0_8, %c0_9] : memref<1x128xf32, #tpu.memory_space<vmem>>, vector<1x128xf32>
    %10 = vector.broadcast %9 : vector<1x128xf32> to vector<208x128xf32>
    %11 = arith.addf %8, %10 : vector<208x128xf32>
    %cst_10 = arith.constant 0.000000e+00 : f32
    %12 = vector.broadcast %cst_10 : f32 to vector<208x128xf32>
    %13 = arith.cmpf ogt, %11, %12 : vector<208x128xf32>
    %cst_11 = arith.constant 3.000000e-01 : f32
    %14 = vector.broadcast %cst_11 : f32 to vector<208x128xf32>
    %15 = arith.mulf %14, %11 : vector<208x128xf32>
    %16 = arith.select %13, %11, %15 : vector<208x128xi1>, vector<208x128xf32>
    %17 = arith.truncf %16 : vector<208x128xf32> to vector<208x128xbf16>
    %c0_12 = arith.constant 0 : index
    %c0_13 = arith.constant 0 : index
    %18 = vector.load %arg5[%c0_12, %c0_13] : memref<128x128xbf16, #tpu.memory_space<vmem>>, vector<128x128xbf16>
    %cst_14 = arith.constant dense<0.000000e+00> : vector<208x128xf32>
    %19 = tpu.matmul %17, %18, %cst_14 {dimension_numbers = #tpu.dot_dimension_numbers<[1], [0], [0], [1], [0, 0, 1, 1], [], []>} : vector<208x128xbf16>, vector<128x128xbf16>, vector<208x128xf32> -> vector<208x128xf32>
    %c0_15 = arith.constant 0 : index
    %c0_16 = arith.constant 0 : index
    %20 = vector.load %arg6[%c0_15, %c0_16] : memref<1x128xf32, #tpu.memory_space<vmem>>, vector<1x128xf32>
    %21 = vector.broadcast %20 : vector<1x128xf32> to vector<208x128xf32>
    %22 = arith.addf %19, %21 : vector<208x128xf32>
    %23 = tpu.iota {dimensions = array<i32: 0>} : vector<208x1xi32>
    %c203_i32 = arith.constant 203 : i32
    %24 = vector.broadcast %c203_i32 : i32 to vector<208x1xi32>
    %25 = arith.cmpi slt, %23, %24 : vector<208x1xi32>
    %cst_17 = arith.constant 0.000000e+00 : f32
    %26 = vector.shape_cast %25 : vector<208x1xi1> to vector<208x1xi1>
    %27 = vector.broadcast %26 : vector<208x1xi1> to vector<208x128xi1>
    %28 = vector.broadcast %cst_17 : f32 to vector<208x128xf32>
    %29 = arith.select %27, %22, %28 : vector<208x128xi1>, vector<208x128xf32>
    %cst_18 = arith.constant dense<0.000000e+00> : vector<128xf32>
    %30 = vector.multi_reduction <add>, %29, %cst_18 [0] : vector<208x128xf32> to vector<128xf32>
    %31 = vector.shape_cast %30 : vector<128xf32> to vector<1x128xf32>
    %cst_19 = arith.constant 0.00492610829 : f32
    %32 = vector.broadcast %cst_19 : f32 to vector<1x128xf32>
    %33 = arith.mulf %31, %32 : vector<1x128xf32>
    %34 = arith.mulf %29, %29 : vector<208x128xf32>
    %cst_20 = arith.constant dense<0.000000e+00> : vector<128xf32>
    %35 = vector.multi_reduction <add>, %34, %cst_20 [0] : vector<208x128xf32> to vector<128xf32>
    %36 = vector.shape_cast %35 : vector<128xf32> to vector<1x128xf32>
    %cst_21 = arith.constant 0.00492610829 : f32
    %37 = vector.broadcast %cst_21 : f32 to vector<1x128xf32>
    %38 = arith.mulf %36, %37 : vector<1x128xf32>
    %39 = arith.mulf %33, %33 : vector<1x128xf32>
    %40 = arith.subf %38, %39 : vector<1x128xf32>
    %cst_22 = arith.constant 0.000000e+00 : f32
    %41 = vector.broadcast %cst_22 : f32 to vector<1x128xf32>
    %42 = arith.maximumf %40, %41 : vector<1x128xf32>
    %c0_23 = arith.constant 0 : index
    %c0_24 = arith.constant 0 : index
    %43 = vector.load %arg7[%c0_23, %c0_24] : memref<1x128xf32, #tpu.memory_space<vmem>>, vector<1x128xf32>
    %cst_25 = arith.constant 9.99999974E-6 : f32
    %44 = vector.broadcast %cst_25 : f32 to vector<1x128xf32>
    %45 = arith.addf %42, %44 : vector<1x128xf32>
    %46 = math.rsqrt %45 : vector<1x128xf32>
    %47 = arith.mulf %43, %46 : vector<1x128xf32>
    %c0_26 = arith.constant 0 : index
    %c0_27 = arith.constant 0 : index
    %48 = vector.load %arg8[%c0_26, %c0_27] : memref<1x128xf32, #tpu.memory_space<vmem>>, vector<1x128xf32>
    %49 = arith.mulf %33, %47 : vector<1x128xf32>
    %50 = arith.subf %48, %49 : vector<1x128xf32>
    %51 = vector.broadcast %47 : vector<1x128xf32> to vector<208x128xf32>
    %52 = arith.mulf %22, %51 : vector<208x128xf32>
    %53 = vector.broadcast %50 : vector<1x128xf32> to vector<208x128xf32>
    %54 = arith.addf %52, %53 : vector<208x128xf32>
    %cst_28 = arith.constant 0.000000e+00 : f32
    %55 = vector.broadcast %cst_28 : f32 to vector<208x128xf32>
    %56 = arith.cmpf ogt, %54, %55 : vector<208x128xf32>
    %cst_29 = arith.constant 3.000000e-01 : f32
    %57 = vector.broadcast %cst_29 : f32 to vector<208x128xf32>
    %58 = arith.mulf %57, %54 : vector<208x128xf32>
    %59 = arith.select %56, %54, %58 : vector<208x128xi1>, vector<208x128xf32>
    %60 = arith.truncf %59 : vector<208x128xf32> to vector<208x128xbf16>
    %c0_30 = arith.constant 0 : index
    %c0_31 = arith.constant 0 : index
    %61 = vector.load %arg9[%c0_30, %c0_31] : memref<128x128xbf16, #tpu.memory_space<vmem>>, vector<128x128xbf16>
    %cst_32 = arith.constant dense<0.000000e+00> : vector<208x128xf32>
    %62 = tpu.matmul %60, %61, %cst_32 {dimension_numbers = #tpu.dot_dimension_numbers<[1], [0], [0], [1], [0, 0, 1, 1], [], []>} : vector<208x128xbf16>, vector<128x128xbf16>, vector<208x128xf32> -> vector<208x128xf32>
    %c0_33 = arith.constant 0 : index
    %c0_34 = arith.constant 0 : index
    %63 = vector.load %arg10[%c0_33, %c0_34] : memref<1x128xf32, #tpu.memory_space<vmem>>, vector<1x128xf32>
    %64 = vector.broadcast %63 : vector<1x128xf32> to vector<208x128xf32>
    %65 = arith.addf %62, %64 : vector<208x128xf32>
    %cst_35 = arith.constant 0.000000e+00 : f32
    %66 = vector.shape_cast %25 : vector<208x1xi1> to vector<208x1xi1>
    %67 = vector.broadcast %66 : vector<208x1xi1> to vector<208x128xi1>
    %68 = vector.broadcast %cst_35 : f32 to vector<208x128xf32>
    %69 = arith.select %67, %65, %68 : vector<208x128xi1>, vector<208x128xf32>
    %cst_36 = arith.constant dense<0.000000e+00> : vector<128xf32>
    %70 = vector.multi_reduction <add>, %69, %cst_36 [0] : vector<208x128xf32> to vector<128xf32>
    %71 = vector.shape_cast %70 : vector<128xf32> to vector<1x128xf32>
    %cst_37 = arith.constant 0.00492610829 : f32
    %72 = vector.broadcast %cst_37 : f32 to vector<1x128xf32>
    %73 = arith.mulf %71, %72 : vector<1x128xf32>
    %74 = arith.mulf %69, %69 : vector<208x128xf32>
    %cst_38 = arith.constant dense<0.000000e+00> : vector<128xf32>
    %75 = vector.multi_reduction <add>, %74, %cst_38 [0] : vector<208x128xf32> to vector<128xf32>
    %76 = vector.shape_cast %75 : vector<128xf32> to vector<1x128xf32>
    %cst_39 = arith.constant 0.00492610829 : f32
    %77 = vector.broadcast %cst_39 : f32 to vector<1x128xf32>
    %78 = arith.mulf %76, %77 : vector<1x128xf32>
    %79 = arith.mulf %73, %73 : vector<1x128xf32>
    %80 = arith.subf %78, %79 : vector<1x128xf32>
    %cst_40 = arith.constant 0.000000e+00 : f32
    %81 = vector.broadcast %cst_40 : f32 to vector<1x128xf32>
    %82 = arith.maximumf %80, %81 : vector<1x128xf32>
    %c0_41 = arith.constant 0 : index
    %c0_42 = arith.constant 0 : index
    %83 = vector.load %arg11[%c0_41, %c0_42] : memref<1x128xf32, #tpu.memory_space<vmem>>, vector<1x128xf32>
    %cst_43 = arith.constant 9.99999974E-6 : f32
    %84 = vector.broadcast %cst_43 : f32 to vector<1x128xf32>
    %85 = arith.addf %82, %84 : vector<1x128xf32>
    %86 = math.rsqrt %85 : vector<1x128xf32>
    %87 = arith.mulf %83, %86 : vector<1x128xf32>
    %c0_44 = arith.constant 0 : index
    %c0_45 = arith.constant 0 : index
    %88 = vector.load %arg12[%c0_44, %c0_45] : memref<1x128xf32, #tpu.memory_space<vmem>>, vector<1x128xf32>
    %89 = arith.mulf %73, %87 : vector<1x128xf32>
    %90 = arith.subf %88, %89 : vector<1x128xf32>
    %c0_46 = arith.constant 0 : index
    %c0_47 = arith.constant 0 : index
    %91 = vector.load %arg0[%c0_46, %c0_47] : memref<208x128xf32, #tpu.memory_space<vmem>>, vector<208x128xf32>
    %92 = vector.broadcast %87 : vector<1x128xf32> to vector<208x128xf32>
    %93 = arith.mulf %65, %92 : vector<208x128xf32>
    %94 = vector.broadcast %90 : vector<1x128xf32> to vector<208x128xf32>
    %95 = arith.addf %93, %94 : vector<208x128xf32>
    %96 = arith.addf %91, %95 : vector<208x128xf32>
    %c0_48 = arith.constant 0 : index
    %c0_49 = arith.constant 0 : index
    %97 = vector.load %arg13[%c0_48, %c0_49] : memref<208x128xf32, #tpu.memory_space<vmem>>, vector<208x128xf32>
    tpu.vector_store %arg13[%c0_48, %c0_49], %96 {strides = array<i32>} : memref<208x128xf32, #tpu.memory_space<vmem>>, vector<208x128xf32>,
    return
  }
}

</mosaic_0001>

<llo_original>
// kernel: conditional_logsig_forward.1
$region0: #{conditional_logsig_forward.1}
  #allocation0 [shape = 'u32[]', space=smem, size = 0x4, offset = 0x4, fixed_abs, tag = 'smem constant byte address 0x4 - core index']
  #allocation1 [shape = 'u32[144,128]{1,0:T(1,128)}', space=vmem, size = 0x12000, scoped, tag = 'internal scratch']
  %s0 = inlined_call_operand.vmem [shape: f32[208,128], index: 0, kind: input, shape index: {}]
  %s1 = inlined_call_operand.vmem [shape: f32[208,16], index: 1, kind: input, shape index: {}]
  %s2 = inlined_call_operand.vmem [shape: bf16[128,128], index: 2, kind: input, shape index: {}]
  %s3 = inlined_call_operand.vmem [shape: bf16[16,128], index: 3, kind: input, shape index: {}]
  %s4 = inlined_call_operand.vmem [shape: f32[1,128], index: 4, kind: input, shape index: {}]
  %s5 = inlined_call_operand.vmem [shape: bf16[128,128], index: 5, kind: input, shape index: {}]
  %s6 = inlined_call_operand.vmem [shape: f32[1,128], index: 6, kind: input, shape index: {}]
  %s7 = inlined_call_operand.vmem [shape: f32[1,128], index: 7, kind: input, shape index: {}]
  %s8 = inlined_call_operand.vmem [shape: f32[1,128], index: 8, kind: input, shape index: {}]
  %s9 = inlined_call_operand.vmem [shape: bf16[128,128], index: 9, kind: input, shape index: {}]
  %s10 = inlined_call_operand.vmem [shape: f32[1,128], index: 10, kind: input, shape index: {}]
  %s11 = inlined_call_operand.vmem [shape: f32[1,128], index: 11, kind: input, shape index: {}]
  %s12 = inlined_call_operand.vmem [shape: f32[1,128], index: 12, kind: input, shape index: {}]
  %s13 = inlined_call_operand.vmem [shape: f32[208,128], index: 13, kind: output, shape index: {}]
  %s14 = sld [smem:[#allocation0]]
  $region62: #{conditional_logsig_forward.1} parent=0
    _
  %s16 = ssub.s32 1, %s14
  %s17 = scalar_select 0, %s16, %s14
  // Predicated region
  $region2: #{conditional_logsig_forward.1} parent=0 // pred_check
    _
  $region3: #{conditional_logsig_forward.1} parent=0 // pred_check_branch
    %19 = sbr.rel (0) target = $region5
  $region4: #{conditional_logsig_forward.1} parent=0 // pred_region
    _
  $region5: #{conditional_logsig_forward.1} parent=0 // pred_fallthru
    _
  // Predicated region
  $region6: #{conditional_logsig_forward.1} parent=0 // pred_check
    _
  $region7: #{conditional_logsig_forward.1} parent=0 // pred_check_branch
    %21 = sbr.rel (0) target = $region9
  $region8: #{conditional_logsig_forward.1} parent=0 // pred_region
    _
  $region9: #{conditional_logsig_forward.1} parent=0 // pred_fallthru
    _
  // Predicated region
  $region10: #{conditional_logsig_forward.1} parent=0 // pred_check
    _
  $region11: #{conditional_logsig_forward.1} parent=0 // pred_check_branch
    %23 = sbr.rel (0) target = $region13
  $region12: #{conditional_logsig_forward.1} parent=0 // pred_region
    _
  $region13: #{conditional_logsig_forward.1} parent=0 // pred_fallthru
    _
  // Predicated region
  $region14: #{conditional_logsig_forward.1} parent=0 // pred_check
    _
  $region15: #{conditional_logsig_forward.1} parent=0 // pred_check_branch
    %25 = sbr.rel (0) target = $region17
  $region16: #{conditional_logsig_forward.1} parent=0 // pred_region
    _
  $region17: #{conditional_logsig_forward.1} parent=0 // pred_fallthru
    _
  // Predicated region
  $region18: #{conditional_logsig_forward.1} parent=0 // pred_check
    _
  $region19: #{conditional_logsig_forward.1} parent=0 // pred_check_branch
    %27 = sbr.rel (0) target = $region21
  $region20: #{conditional_logsig_forward.1} parent=0 // pred_region
    _
  $region21: #{conditional_logsig_forward.1} parent=0 // pred_fallthru
    _
  // Predicated region
  $region22: #{conditional_logsig_forward.1} parent=0 // pred_check
    _
  $region23: #{conditional_logsig_forward.1} parent=0 // pred_check_branch
    %29 = sbr.rel (0) target = $region25
  $region24: #{conditional_logsig_forward.1} parent=0 // pred_region
    _
  $region25: #{conditional_logsig_forward.1} parent=0 // pred_fallthru
    _
  // Predicated region
  $region26: #{conditional_logsig_forward.1} parent=0 // pred_check
    _
  $region27: #{conditional_logsig_forward.1} parent=0 // pred_check_branch
    %31 = sbr.rel (0) target = $region29
  $region28: #{conditional_logsig_forward.1} parent=0 // pred_region
    _
  $region29: #{conditional_logsig_forward.1} parent=0 // pred_fallthru
    _
  // Predicated region
  $region30: #{conditional_logsig_forward.1} parent=0 // pred_check
    _
  $region31: #{conditional_logsig_forward.1} parent=0 // pred_check_branch
    %33 = sbr.rel (0) target = $region33
  $region32: #{conditional_logsig_forward.1} parent=0 // pred_region
    _
  $region33: #{conditional_logsig_forward.1} parent=0 // pred_fallthru
    _
  // Predicated region
  $region34: #{conditional_logsig_forward.1} parent=0 // pred_check
    _
  $region35: #{conditional_logsig_forward.1} parent=0 // pred_check_branch
    %35 = sbr.rel (0) target = $region37
  $region36: #{conditional_logsig_forward.1} parent=0 // pred_region
    _
  $region37: #{conditional_logsig_forward.1} parent=0 // pred_fallthru
    _
  // Predicated region
  $region38: #{conditional_logsig_forward.1} parent=0 // pred_check
    _
  $region39: #{conditional_logsig_forward.1} parent=0 // pred_check_branch
    %37 = sbr.rel (0) target = $region41
  $region40: #{conditional_logsig_forward.1} parent=0 // pred_region
    _
  $region41: #{conditional_logsig_forward.1} parent=0 // pred_fallthru
    _
  // Predicated region
  $region42: #{conditional_logsig_forward.1} parent=0 // pred_check
    _
  $region43: #{conditional_logsig_forward.1} parent=0 // pred_check_branch
    %39 = sbr.rel (0) target = $region45
  $region44: #{conditional_logsig_forward.1} parent=0 // pred_region
    _
  $region45: #{conditional_logsig_forward.1} parent=0 // pred_fallthru
    _
  // Predicated region
  $region46: #{conditional_logsig_forward.1} parent=0 // pred_check
    _
  $region47: #{conditional_logsig_forward.1} parent=0 // pred_check_branch
    %41 = sbr.rel (0) target = $region49
  $region48: #{conditional_logsig_forward.1} parent=0 // pred_region
    _
  $region49: #{conditional_logsig_forward.1} parent=0 // pred_fallthru
    _
  // Predicated region
  $region50: #{conditional_logsig_forward.1} parent=0 // pred_check
    _
  $region51: #{conditional_logsig_forward.1} parent=0 // pred_check_branch
    %43 = sbr.rel (0) target = $region53
  $region52: #{conditional_logsig_forward.1} parent=0 // pred_region
    _
  $region53: #{conditional_logsig_forward.1} parent=0 // pred_fallthru
    _
  %v45 = vld [vmem:[%s0] sm:$0xff]
  %v46 = vld [vmem:[%s0 + $0x8] sm:$0xff]
  %v47 = vld [vmem:[%s0 + $0x10] sm:$0xff]
  %v48 = vld [vmem:[%s0 + $0x18] sm:$0xff]
  %v49 = vld [vmem:[%s0 + $0x20] sm:$0xff]
  %v50 = vld [vmem:[%s0 + $0x28] sm:$0xff]
  %v51 = vld [vmem:[%s0 + $0x30] sm:$0xff]
  %v52 = vld [vmem:[%s0 + $0x38] sm:$0xff]
  %v53 = vld [vmem:[%s0 + $0x40] sm:$0xff]
  %v54 = vld [vmem:[%s0 + $0x48] sm:$0xff]
  %v55 = vld [vmem:[%s0 + $0x50] sm:$0xff]
  %v56 = vld [vmem:[%s0 + $0x58] sm:$0xff]
  %v57 = vld [vmem:[%s0 + $0x60] sm:$0xff]
  %v58 = vld [vmem:[%s0 + $0x68] sm:$0xff]
  %v59 = vld [vmem:[%s0 + $0x70] sm:$0xff]
  %v60 = vld [vmem:[%s0 + $0x78] sm:$0xff]
  %v61 = vld [vmem:[%s0 + $0x80] sm:$0xff]
  %v62 = vld [vmem:[%s0 + $0x88] sm:$0xff]
  %v63 = vld [vmem:[%s0 + $0x90] sm:$0xff]
  %v64 = vld [vmem:[%s0 + $0x98] sm:$0xff]
  %v65 = vld [vmem:[%s0 + $0xa0] sm:$0xff]
  %v66 = vld [vmem:[%s0 + $0xa8] sm:$0xff]
  %v67 = vld [vmem:[%s0 + $0xb0] sm:$0xff]
  %v68 = vld [vmem:[%s0 + $0xb8] sm:$0xff]
  %v69 = vld [vmem:[%s0 + $0xc0] sm:$0xff]
  %v70 = vld [vmem:[%s0 + $0xc8] sm:$0xff]
  %v71 = vpack.c.bf16 %v46, %v45
  %v72 = vpack.c.bf16 %v48, %v47
  %v73 = vpack.c.bf16 %v50, %v49
  %v74 = vpack.c.bf16 %v52, %v51
  %v75 = vpack.c.bf16 %v54, %v53
  %v76 = vpack.c.bf16 %v56, %v55
  %v77 = vpack.c.bf16 %v58, %v57
  %v78 = vpack.c.bf16 %v60, %v59
  %v79 = vpack.c.bf16 %v62, %v61
  %v80 = vpack.c.bf16 %v64, %v63
  %v81 = vpack.c.bf16 %v66, %v65
  %v82 = vpack.c.bf16 %v68, %v67
  %v83 = vpack.c.bf16 %v70, %v69
  %v84 = vld [vmem:[%s2] sm:$0xf]
  %v85 = vld [vmem:[%s2 + $0x4] sm:$0xf]
  %v86 = vld [vmem:[%s2 + $0x8] sm:$0xf]
  %v87 = vld [vmem:[%s2 + $0xc] sm:$0xf]
  %v88 = vld [vmem:[%s2 + $0x10] sm:$0xf]
  %v89 = vld [vmem:[%s2 + $0x14] sm:$0xf]
  %v90 = vld [vmem:[%s2 + $0x18] sm:$0xf]
  %v91 = vld [vmem:[%s2 + $0x1c] sm:$0xf]
  %v92 = vld [vmem:[%s2 + $0x20] sm:$0xf]
  %v93 = vld [vmem:[%s2 + $0x24] sm:$0xf]
  %v94 = vld [vmem:[%s2 + $0x28] sm:$0xf]
  %v95 = vld [vmem:[%s2 + $0x2c] sm:$0xf]
  %v96 = vld [vmem:[%s2 + $0x30] sm:$0xf]
  %v97 = vld [vmem:[%s2 + $0x34] sm:$0xf]
  %v98 = vld [vmem:[%s2 + $0x38] sm:$0xf]
  %v99 = vld [vmem:[%s2 + $0x3c] sm:$0xf]
  %v100 = vld [vmem:[%s1] sm:$0xff]
  %v101 = vld [vmem:[%s1 + $0x8] sm:$0xff]
  %v102 = vld [vmem:[%s1 + $0x10] sm:$0xff]
  %v103 = vld [vmem:[%s1 + $0x18] sm:$0xff]
  %v104 = vld [vmem:[%s1 + $0x20] sm:$0xff]
  %v105 = vld [vmem:[%s1 + $0x28] sm:$0xff]
  %v106 = vld [vmem:[%s1 + $0x30] sm:$0xff]
  %v107 = vld [vmem:[%s1 + $0x38] sm:$0xff]
  %v108 = vld [vmem:[%s1 + $0x40] sm:$0xff]
  %v109 = vld [vmem:[%s1 + $0x48] sm:$0xff]
  %v110 = vld [vmem:[%s1 + $0x50] sm:$0xff]
  %v111 = vld [vmem:[%s1 + $0x58] sm:$0xff]
  %v112 = vld [vmem:[%s1 + $0x60] sm:$0xff]
  %v113 = vld [vmem:[%s1 + $0x68] sm:$0xff]
  %v114 = vld [vmem:[%s1 + $0x70] sm:$0xff]
  %v115 = vld [vmem:[%s1 + $0x78] sm:$0xff]
  %v116 = vld [vmem:[%s1 + $0x80] sm:$0xff]
  %v117 = vld [vmem:[%s1 + $0x88] sm:$0xff]
  %v118 = vld [vmem:[%s1 + $0x90] sm:$0xff]
  %v119 = vld [vmem:[%s1 + $0x98] sm:$0xff]
  %v120 = vld [vmem:[%s1 + $0xa0] sm:$0xff]
  %v121 = vld [vmem:[%s1 + $0xa8] sm:$0xff]
  %v122 = vld [vmem:[%s1 + $0xb0] sm:$0xff]
  %v123 = vld [vmem:[%s1 + $0xb8] sm:$0xff]
  %v124 = vld [vmem:[%s1 + $0xc0] sm:$0xff]
  %v125 = vld [vmem:[%s1 + $0xc8] sm:$0xff]
  %v126 = vpack.c.bf16 %v101, %v100
  %v127 = vpack.c.bf16 %v103, %v102
  %v128 = vpack.c.bf16 %v105, %v104
  %v129 = vpack.c.bf16 %v107, %v106
  %v130 = vpack.c.bf16 %v109, %v108
  %v131 = vpack.c.bf16 %v111, %v110
  %v132 = vpack.c.bf16 %v113, %v112
  %v133 = vpack.c.bf16 %v115, %v114
  %v134 = vpack.c.bf16 %v117, %v116
  %v135 = vpack.c.bf16 %v119, %v118
  %v136 = vpack.c.bf16 %v121, %v120
  %v137 = vpack.c.bf16 %v123, %v122
  %v138 = vpack.c.bf16 %v125, %v124
  %v139 = vld [vmem:[%s3] sm:$0xf]
  %v140 = vld [vmem:[%s3 + $0x4] sm:$0xf]
  %v143 = vunpack.c.l.b16 %v139
  %v144 = vunpack.c.l.b16 %v140
  %v145 = vpack.c.b16 %v144, %v143
  %vm147 = vcmask 130048
  %v149 = vsel %vm147, %v126, 0
  %v152 = vsel %vm147, %v127, 0
  %v155 = vsel %vm147, %v128, 0
  %v158 = vsel %vm147, %v129, 0
  %v161 = vsel %vm147, %v130, 0
  %v164 = vsel %vm147, %v131, 0
  %v167 = vsel %vm147, %v132, 0
  %v170 = vsel %vm147, %v133, 0
  %v173 = vsel %vm147, %v134, 0
  %v176 = vsel %vm147, %v135, 0
  %v179 = vsel %vm147, %v136, 0
  %v182 = vsel %vm147, %v137, 0
  %v185 = vsel %vm147, %v138, 0
  %187 = vmatprep.subr.bf16.mxu0 0
  %188 = vmatpush1.bf16.msra.mxu0 %v145
  %189 = vmatprep.subr.bf16.mxu0 0
  %190 = vmatpush1.bf16.msra.mxu0 0
  %191 = vmatprep.subr.bf16.mxu0 0
  %192 = vmatpush1.bf16.msra.mxu0 0
  %193 = vmatprep.subr.bf16.mxu0 0
  %194 = vmatpush1.bf16.msra.mxu0 0
  %195 = vmatprep.subr.bf16.mxu0 0
  %196 = vmatpush1.bf16.msra.mxu0 0
  %197 = vmatprep.subr.bf16.mxu0 0
  %198 = vmatpush1.bf16.msra.mxu0 0
  %199 = vmatprep.subr.bf16.mxu0 0
  %200 = vmatpush1.bf16.msra.mxu0 0
  %201 = vmatprep.subr.bf16.mxu0 0
  %202 = vmatpush1.bf16.msra.mxu0 0
  %203 = vmatprep.subr.bf16.mxu0 0
  %204 = vmatpush1.bf16.msra.mxu0 0
  %205 = vmatprep.subr.bf16.mxu0 0
  %206 = vmatpush1.bf16.msra.mxu0 0
  %207 = vmatprep.subr.bf16.mxu0 0
  %208 = vmatpush1.bf16.msra.mxu0 0
  %209 = vmatprep.subr.bf16.mxu0 0
  %210 = vmatpush1.bf16.msra.mxu0 0
  %211 = vmatprep.subr.bf16.mxu0 0
  %212 = vmatpush1.bf16.msra.mxu0 0
  %213 = vmatprep.subr.bf16.mxu0 0
  %214 = vmatpush1.bf16.msra.mxu0 0
  %215 = vmatprep.subr.bf16.mxu0 0
  %216 = vmatpush1.bf16.msra.mxu0 0
  %217 = vmatprep.subr.bf16.mxu0 0
  %218 = vmatpush1.bf16.msra.mxu0 0
  %219 = vmatprep.mubr.bf16.mxu0 0
  %220 = vmatmul.mubr.bf16.gmra.mrb[0].mxu0 %v149
  %v221 = vpop.f32.mrb[0].mxu0
  %v222 = vadd.f32 0.0, %v221
  %v223 = vpop.f32.mrb[0].mxu0
  %v224 = vpop.f32.mrb[0].mxu0
  %v225 = vadd.f32 0.0, %v224
  %v226 = vpop.f32.mrb[0].mxu0
  %227 = vmatprep.mubr.bf16.mxu0 0
  %228 = vmatmul.mubr.bf16.gmra.mrb[0].mxu0 %v152
  %v229 = vpop.f32.mrb[0].mxu0
  %v230 = vadd.f32 0.0, %v229
  %v231 = vpop.f32.mrb[0].mxu0
  %v232 = vpop.f32.mrb[0].mxu0
  %v233 = vadd.f32 0.0, %v232
  %v234 = vpop.f32.mrb[0].mxu0
  %235 = vmatprep.mubr.bf16.mxu0 0
  %236 = vmatmul.mubr.bf16.gmra.mrb[0].mxu0 %v155
  %v237 = vpop.f32.mrb[0].mxu0
  %v238 = vadd.f32 0.0, %v237
  %v239 = vpop.f32.mrb[0].mxu0
  %v240 = vpop.f32.mrb[0].mxu0
  %v241 = vadd.f32 0.0, %v240
  %v242 = vpop.f32.mrb[0].mxu0
  %243 = vmatprep.mubr.bf16.mxu0 0
  %244 = vmatmul.mubr.bf16.gmra.mrb[0].mxu0 %v158
  %v245 = vpop.f32.mrb[0].mxu0
  %v246 = vadd.f32 0.0, %v245
  %v247 = vpop.f32.mrb[0].mxu0
  %v248 = vpop.f32.mrb[0].mxu0
  %v249 = vadd.f32 0.0, %v248
  %v250 = vpop.f32.mrb[0].mxu0
  %251 = vmatprep.mubr.bf16.mxu0 0
  %252 = vmatmul.mubr.bf16.gmra.mrb[0].mxu0 %v161
  %v253 = vpop.f32.mrb[0].mxu0
  %v254 = vadd.f32 0.0, %v253
  %v255 = vpop.f32.mrb[0].mxu0
  %v256 = vpop.f32.mrb[0].mxu0
  %v257 = vadd.f32 0.0, %v256
  %v258 = vpop.f32.mrb[0].mxu0
  %259 = vmatprep.mubr.bf16.mxu0 0
  %260 = vmatmul.mubr.bf16.gmra.mrb[0].mxu0 %v164
  %v261 = vpop.f32.mrb[0].mxu0
  %v262 = vadd.f32 0.0, %v261
  %v263 = vpop.f32.mrb[0].mxu0
  %v264 = vpop.f32.mrb[0].mxu0
  %v265 = vadd.f32 0.0, %v264
  %v266 = vpop.f32.mrb[0].mxu0
  %267 = vmatprep.mubr.bf16.mxu0 0
  %268 = vmatmul.mubr.bf16.gmra.mrb[0].mxu0 %v167
  %v269 = vpop.f32.mrb[0].mxu0
  %v270 = vadd.f32 0.0, %v269
  %v271 = vpop.f32.mrb[0].mxu0
  %v272 = vpop.f32.mrb[0].mxu0
  %v273 = vadd.f32 0.0, %v272
  %v274 = vpop.f32.mrb[0].mxu0
  %275 = vmatprep.mubr.bf16.mxu0 0
  %276 = vmatmul.mubr.bf16.gmra.mrb[0].mxu0 %v170
  %v277 = vpop.f32.mrb[0].mxu0
  %v278 = vadd.f32 0.0, %v277
  %v279 = vpop.f32.mrb[0].mxu0
  %v280 = vpop.f32.mrb[0].mxu0
  %v281 = vadd.f32 0.0, %v280
  %v282 = vpop.f32.mrb[0].mxu0
  %283 = vmatprep.mubr.bf16.mxu0 0
  %284 = vmatmul.mubr.bf16.gmra.mrb[0].mxu0 %v173
  %v285 = vpop.f32.mrb[0].mxu0
  %v286 = vadd.f32 0.0, %v285
  %v287 = vpop.f32.mrb[0].mxu0
  %v288 = vpop.f32.mrb[0].mxu0
  %v289 = vadd.f32 0.0, %v288
  %v290 = vpop.f32.mrb[0].mxu0
  %291 = vmatprep.mubr.bf16.mxu0 0
  %292 = vmatmul.mubr.bf16.gmra.mrb[0].mxu0 %v176
  %v293 = vpop.f32.mrb[0].mxu0
  %v294 = vadd.f32 0.0, %v293
  %v295 = vpop.f32.mrb[0].mxu0
  %v296 = vpop.f32.mrb[0].mxu0
  %v297 = vadd.f32 0.0, %v296
  %v298 = vpop.f32.mrb[0].mxu0
  %299 = vmatprep.mubr.bf16.mxu0 0
  %300 = vmatmul.mubr.bf16.gmra.mrb[0].mxu0 %v179
  %v301 = vpop.f32.mrb[0].mxu0
  %v302 = vadd.f32 0.0, %v301
  %v303 = vpop.f32.mrb[0].mxu0
  %v304 = vpop.f32.mrb[0].mxu0
  %v305 = vadd.f32 0.0, %v304
  %v306 = vpop.f32.mrb[0].mxu0
  %307 = vmatprep.mubr.bf16.mxu0 0
  %308 = vmatmul.mubr.bf16.gmra.mrb[0].mxu0 %v182
  %v309 = vpop.f32.mrb[0].mxu0
  %v310 = vadd.f32 0.0, %v309
  %v311 = vpop.f32.mrb[0].mxu0
  %v312 = vpop.f32.mrb[0].mxu0
  %v313 = vadd.f32 0.0, %v312
  %v314 = vpop.f32.mrb[0].mxu0
  %315 = vmatprep.mubr.bf16.mxu0 0
  %316 = vmatmul.mubr.bf16.gmra.mrb[0].mxu0 %v185
  %v317 = vpop.f32.mrb[0].mxu0
  %v318 = vadd.f32 0.0, %v317
  %v319 = vpop.f32.mrb[0].mxu0
  %v320 = vpop.f32.mrb[0].mxu0
  %v321 = vadd.f32 0.0, %v320
  %v322 = vpop.f32.mrb[0].mxu0
  %323 = vdwg.mxu0
  %v340 = vunpack.c.l.b16 %v84
  %v341 = vunpack.c.l.b16 %v85
  %v342 = vunpack.c.l.b16 %v86
  %v343 = vunpack.c.l.b16 %v87
  %v344 = vunpack.c.l.b16 %v88
  %v345 = vunpack.c.l.b16 %v89
  %v346 = vunpack.c.l.b16 %v90
  %v347 = vunpack.c.l.b16 %v91
  %v348 = vunpack.c.l.b16 %v92
  %v349 = vunpack.c.l.b16 %v93
  %v350 = vunpack.c.l.b16 %v94
  %v351 = vunpack.c.l.b16 %v95
  %v352 = vunpack.c.l.b16 %v96
  %v353 = vunpack.c.l.b16 %v97
  %v354 = vunpack.c.l.b16 %v98
  %v355 = vunpack.c.l.b16 %v99
  %v356 = vpack.c.b16 %v341, %v340
  %v357 = vpack.c.b16 %v343, %v342
  %v358 = vpack.c.b16 %v345, %v344
  %v359 = vpack.c.b16 %v347, %v346
  %v360 = vpack.c.b16 %v349, %v348
  %v361 = vpack.c.b16 %v351, %v350
  %v362 = vpack.c.b16 %v353, %v352
  %v363 = vpack.c.b16 %v355, %v354
  %372 = vmatprep.subr.bf16.mxu0 0
  %373 = vmatpush1.bf16.msra.mxu0 %v356
  %374 = vmatprep.subr.bf16.mxu0 0
  %375 = vmatpush1.bf16.msra.mxu0 %v357
  %376 = vmatprep.subr.bf16.mxu0 0
  %377 = vmatpush1.bf16.msra.mxu0 %v358
  %378 = vmatprep.subr.bf16.mxu0 0
  %379 = vmatpush1.bf16.msra.mxu0 %v359
  %380 = vmatprep.subr.bf16.mxu0 0
  %381 = vmatpush1.bf16.msra.mxu0 %v360
  %382 = vmatprep.subr.bf16.mxu0 0
  %383 = vmatpush1.bf16.msra.mxu0 %v361
  %384 = vmatprep.subr.bf16.mxu0 0
  %385 = vmatpush1.bf16.msra.mxu0 %v362
  %386 = vmatprep.subr.bf16.mxu0 0
  %387 = vmatpush1.bf16.msra.mxu0 %v363
  %388 = vmatprep.subr.bf16.mxu0 0
  %389 = vmatpush1.bf16.msra.mxu0 0
  %390 = vmatprep.subr.bf16.mxu0 0
  %391 = vmatpush1.bf16.msra.mxu0 0
  %392 = vmatprep.subr.bf16.mxu0 0
  %393 = vmatpush1.bf16.msra.mxu0 0
  %394 = vmatprep.subr.bf16.mxu0 0
  %395 = vmatpush1.bf16.msra.mxu0 0
  %396 = vmatprep.subr.bf16.mxu0 0
  %397 = vmatpush1.bf16.msra.mxu0 0
  %398 = vmatprep.subr.bf16.mxu0 0
  %399 = vmatpush1.bf16.msra.mxu0 0
  %400 = vmatprep.subr.bf16.mxu0 0
  %401 = vmatpush1.bf16.msra.mxu0 0
  %402 = vmatprep.subr.bf16.mxu0 0
  %403 = vmatpush1.bf16.msra.mxu0 0
  %404 = vmatprep.mubr.bf16.mxu0 0
  %405 = vmatmul.mubr.bf16.gmra.mrb[0].mxu0 %v71
  %v406 = vpop.f32.mrb[0].mxu0
  %v407 = vadd.f32 %v222, %v406
  %v408 = vpop.f32.mrb[0].mxu0
  %v409 = vpop.f32.mrb[0].mxu0
  %v410 = vadd.f32 %v225, %v409
  %v411 = vpop.f32.mrb[0].mxu0
  %412 = vmatprep.mubr.bf16.mxu0 0
  %413 = vmatmul.mubr.bf16.gmra.mrb[0].mxu0 %v72
  %v414 = vpop.f32.mrb[0].mxu0
  %v415 = vadd.f32 %v230, %v414
  %v416 = vpop.f32.mrb[0].mxu0
  %v417 = vpop.f32.mrb[0].mxu0
  %v418 = vadd.f32 %v233, %v417
  %v419 = vpop.f32.mrb[0].mxu0
  %420 = vmatprep.mubr.bf16.mxu0 0
  %421 = vmatmul.mubr.bf16.gmra.mrb[0].mxu0 %v73
  %v422 = vpop.f32.mrb[0].mxu0
  %v423 = vadd.f32 %v238, %v422
  %v424 = vpop.f32.mrb[0].mxu0
  %v425 = vpop.f32.mrb[0].mxu0
  %v426 = vadd.f32 %v241, %v425
  %v427 = vpop.f32.mrb[0].mxu0
  %428 = vmatprep.mubr.bf16.mxu0 0
  %429 = vmatmul.mubr.bf16.gmra.mrb[0].mxu0 %v74
  %v430 = vpop.f32.mrb[0].mxu0
  %v431 = vadd.f32 %v246, %v430
  %v432 = vpop.f32.mrb[0].mxu0
  %v433 = vpop.f32.mrb[0].mxu0
  %v434 = vadd.f32 %v249, %v433
  %v435 = vpop.f32.mrb[0].mxu0
  %436 = vmatprep.mubr.bf16.mxu0 0
  %437 = vmatmul.mubr.bf16.gmra.mrb[0].mxu0 %v75
  %v438 = vpop.f32.mrb[0].mxu0
  %v439 = vadd.f32 %v254, %v438
  %v440 = vpop.f32.mrb[0].mxu0
  %v441 = vpop.f32.mrb[0].mxu0
  %v442 = vadd.f32 %v257, %v441
  %v443 = vpop.f32.mrb[0].mxu0
  %444 = vmatprep.mubr.bf16.mxu0 0
  %445 = vmatmul.mubr.bf16.gmra.mrb[0].mxu0 %v76
  %v446 = vpop.f32.mrb[0].mxu0
  %v447 = vadd.f32 %v262, %v446
  %v448 = vpop.f32.mrb[0].mxu0
  %v449 = vpop.f32.mrb[0].mxu0
  %v450 = vadd.f32 %v265, %v449
  %v451 = vpop.f32.mrb[0].mxu0
  %452 = vmatprep.mubr.bf16.mxu0 0
  %453 = vmatmul.mubr.bf16.gmra.mrb[0].mxu0 %v77
  %v454 = vpop.f32.mrb[0].mxu0
  %v455 = vadd.f32 %v270, %v454
  %v456 = vpop.f32.mrb[0].mxu0
  %v457 = vpop.f32.mrb[0].mxu0
  %v458 = vadd.f32 %v273, %v457
  %v459 = vpop.f32.mrb[0].mxu0
  %460 = vmatprep.mubr.bf16.mxu0 0
  %461 = vmatmul.mubr.bf16.gmra.mrb[0].mxu0 %v78
  %v462 = vpop.f32.mrb[0].mxu0
  %v463 = vadd.f32 %v278, %v462
  %v464 = vpop.f32.mrb[0].mxu0
  %v465 = vpop.f32.mrb[0].mxu0
  %v466 = vadd.f32 %v281, %v465
  %v467 = vpop.f32.mrb[0].mxu0
  %468 = vmatprep.mubr.bf16.mxu0 0
  %469 = vmatmul.mubr.bf16.gmra.mrb[0].mxu0 %v79
  %v470 = vpop.f32.mrb[0].mxu0
  %v471 = vadd.f32 %v286, %v470
  %v472 = vpop.f32.mrb[0].mxu0
  %v473 = vpop.f32.mrb[0].mxu0
  %v474 = vadd.f32 %v289, %v473
  %v475 = vpop.f32.mrb[0].mxu0
  %476 = vmatprep.mubr.bf16.mxu0 0
  %477 = vmatmul.mubr.bf16.gmra.mrb[0].mxu0 %v80
  %v478 = vpop.f32.mrb[0].mxu0
  %v479 = vadd.f32 %v294, %v478
  %v480 = vpop.f32.mrb[0].mxu0
  %v481 = vpop.f32.mrb[0].mxu0
  %v482 = vadd.f32 %v297, %v481
  %v483 = vpop.f32.mrb[0].mxu0
  %484 = vmatprep.mubr.bf16.mxu0 0
  %485 = vmatmul.mubr.bf16.gmra.mrb[0].mxu0 %v81
  %v486 = vpop.f32.mrb[0].mxu0
  %v487 = vadd.f32 %v302, %v486
  %v488 = vpop.f32.mrb[0].mxu0
  %v489 = vpop.f32.mrb[0].mxu0
  %v490 = vadd.f32 %v305, %v489
  %v491 = vpop.f32.mrb[0].mxu0
  %492 = vmatprep.mubr.bf16.mxu0 0
  %493 = vmatmul.mubr.bf16.gmra.mrb[0].mxu0 %v82
  %v494 = vpop.f32.mrb[0].mxu0
  %v495 = vadd.f32 %v310, %v494
  %v496 = vpop.f32.mrb[0].mxu0
  %v497 = vpop.f32.mrb[0].mxu0
  %v498 = vadd.f32 %v313, %v497
  %v499 = vpop.f32.mrb[0].mxu0
  %500 = vmatprep.mubr.bf16.mxu0 0
  %501 = vmatmul.mubr.bf16.gmra.mrb[0].mxu0 %v83
  %v502 = vpop.f32.mrb[0].mxu0
  %v503 = vadd.f32 %v318, %v502
  %v504 = vpop.f32.mrb[0].mxu0
  %v505 = vpop.f32.mrb[0].mxu0
  %v506 = vadd.f32 %v321, %v505
  %v507 = vpop.f32.mrb[0].mxu0
  %508 = vdwg.mxu0
  %v509 = vld [vmem:[%s4] sm:$0x1]
  %v511 = vlaneseq
  %v512 = vshrl.u32 %v511, 7
  %v513 = vsub.s32 0, %v512
  %v514 = vrot.slane %v509, %v513
  %v516 = vadd.f32 %v407, %v514
  %v517 = vadd.f32 %v410, %v514
  %v518 = vadd.f32 %v415, %v514
  %v519 = vadd.f32 %v418, %v514
  %v520 = vadd.f32 %v423, %v514
  %v521 = vadd.f32 %v426, %v514
  %v522 = vadd.f32 %v431, %v514
  %v523 = vadd.f32 %v434, %v514
  %v524 = vadd.f32 %v439, %v514
  %v525 = vadd.f32 %v442, %v514
  %v526 = vadd.f32 %v447, %v514
  %v527 = vadd.f32 %v450, %v514
  %v528 = vadd.f32 %v455, %v514
  %v529 = vadd.f32 %v458, %v514
  %v530 = vadd.f32 %v463, %v514
  %v531 = vadd.f32 %v466, %v514
  %v532 = vadd.f32 %v471, %v514
  %v533 = vadd.f32 %v474, %v514
  %v534 = vadd.f32 %v479, %v514
  %v535 = vadd.f32 %v482, %v514
  %v536 = vadd.f32 %v487, %v514
  %v537 = vadd.f32 %v490, %v514
  %v538 = vadd.f32 %v495, %v514
  %v539 = vadd.f32 %v498, %v514
  %v540 = vadd.f32 %v503, %v514
  %v541 = vadd.f32 %v506, %v514
  %vm542 = vcmp.gt.f32.partialorder %v516, 0.0
  %vm543 = vcmp.gt.f32.partialorder %v517, 0.0
  %vm544 = vcmp.gt.f32.partialorder %v518, 0.0
  %vm545 = vcmp.gt.f32.partialorder %v519, 0.0
  %vm546 = vcmp.gt.f32.partialorder %v520, 0.0
  %vm547 = vcmp.gt.f32.partialorder %v521, 0.0
  %vm548 = vcmp.gt.f32.partialorder %v522, 0.0
  %vm549 = vcmp.gt.f32.partialorder %v523, 0.0
  %vm550 = vcmp.gt.f32.partialorder %v524, 0.0
  %vm551 = vcmp.gt.f32.partialorder %v525, 0.0
  %vm552 = vcmp.gt.f32.partialorder %v526, 0.0
  %vm553 = vcmp.gt.f32.partialorder %v527, 0.0
  %vm554 = vcmp.gt.f32.partialorder %v528, 0.0
  %vm555 = vcmp.gt.f32.partialorder %v529, 0.0
  %vm556 = vcmp.gt.f32.partialorder %v530, 0.0
  %vm557 = vcmp.gt.f32.partialorder %v531, 0.0
  %vm558 = vcmp.gt.f32.partialorder %v532, 0.0
  %vm559 = vcmp.gt.f32.partialorder %v533, 0.0
  %vm560 = vcmp.gt.f32.partialorder %v534, 0.0
  %vm561 = vcmp.gt.f32.partialorder %v535, 0.0
  %vm562 = vcmp.gt.f32.partialorder %v536, 0.0
  %vm563 = vcmp.gt.f32.partialorder %v537, 0.0
  %vm564 = vcmp.gt.f32.partialorder %v538, 0.0
  %vm565 = vcmp.gt.f32.partialorder %v539, 0.0
  %vm566 = vcmp.gt.f32.partialorder %v540, 0.0
  %vm567 = vcmp.gt.f32.partialorder %v541, 0.0
  %v568 = vmul.f32 %v516, 0.3
  %v569 = vmul.f32 %v517, 0.3
  %v570 = vmul.f32 %v518, 0.3
  %v571 = vmul.f32 %v519, 0.3
  %v572 = vmul.f32 %v520, 0.3
  %v573 = vmul.f32 %v521, 0.3
  %v574 = vmul.f32 %v522, 0.3
  %v575 = vmul.f32 %v523, 0.3
  %v576 = vmul.f32 %v524, 0.3
  %v577 = vmul.f32 %v525, 0.3
  %v578 = vmul.f32 %v526, 0.3
  %v579 = vmul.f32 %v527, 0.3
  %v580 = vmul.f32 %v528, 0.3
  %v581 = vmul.f32 %v529, 0.3
  %v582 = vmul.f32 %v530, 0.3
  %v583 = vmul.f32 %v531, 0.3
  %v584 = vmul.f32 %v532, 0.3
  %v585 = vmul.f32 %v533, 0.3
  %v586 = vmul.f32 %v534, 0.3
  %v587 = vmul.f32 %v535, 0.3
  %v588 = vmul.f32 %v536, 0.3
  %v589 = vmul.f32 %v537, 0.3
  %v590 = vmul.f32 %v538, 0.3
  %v591 = vmul.f32 %v539, 0.3
  %v592 = vmul.f32 %v540, 0.3
  %v593 = vmul.f32 %v541, 0.3
  %v594 = vsel %vm542, %v516, %v568
  %v595 = vsel %vm543, %v517, %v569
  %v596 = vsel %vm544, %v518, %v570
  %v597 = vsel %vm545, %v519, %v571
  %v598 = vsel %vm546, %v520, %v572
  %v599 = vsel %vm547, %v521, %v573
  %v600 = vsel %vm548, %v522, %v574
  %v601 = vsel %vm549, %v523, %v575
  %v602 = vsel %vm550, %v524, %v576
  %v603 = vsel %vm551, %v525, %v577
  %v604 = vsel %vm552, %v526, %v578
  %v605 = vsel %vm553, %v527, %v579
  %v606 = vsel %vm554, %v528, %v580
  %v607 = vsel %vm555, %v529, %v581
  %v608 = vsel %vm556, %v530, %v582
  %v609 = vsel %vm557, %v531, %v583
  %v610 = vsel %vm558, %v532, %v584
  %v611 = vsel %vm559, %v533, %v585
  %v612 = vsel %vm560, %v534, %v586
  %v613 = vsel %vm561, %v535, %v587
  %v614 = vsel %vm562, %v536, %v588
  %v615 = vsel %vm563, %v537, %v589
  %v616 = vsel %vm564, %v538, %v590
  %v617 = vsel %vm565, %v539, %v591
  %v618 = vsel %vm566, %v540, %v592
  %v619 = vsel %vm567, %v541, %v593
  %v620 = vpack.c.bf16 %v595, %v594
  %v621 = vpack.c.bf16 %v597, %v596
  %v622 = vpack.c.bf16 %v599, %v598
  %v623 = vpack.c.bf16 %v601, %v600
  %v624 = vpack.c.bf16 %v603, %v602
  %v625 = vpack.c.bf16 %v605, %v604
  %v626 = vpack.c.bf16 %v607, %v606
  %v627 = vpack.c.bf16 %v609, %v608
  %v628 = vpack.c.bf16 %v611, %v610
  %v629 = vpack.c.bf16 %v613, %v612
  %v630 = vpack.c.bf16 %v615, %v614
  %v631 = vpack.c.bf16 %v617, %v616
  %v632 = vpack.c.bf16 %v619, %v618
  %v633 = vld [vmem:[%s5] sm:$0xf]
  %v634 = vld [vmem:[%s5 + $0x4] sm:$0xf]
  %v635 = vld [vmem:[%s5 + $0x8] sm:$0xf]
  %v636 = vld [vmem:[%s5 + $0xc] sm:$0xf]
  %v637 = vld [vmem:[%s5 + $0x10] sm:$0xf]
  %v638 = vld [vmem:[%s5 + $0x14] sm:$0xf]
  %v639 = vld [vmem:[%s5 + $0x18] sm:$0xf]
  %v640 = vld [vmem:[%s5 + $0x1c] sm:$0xf]
  %v641 = vld [vmem:[%s5 + $0x20] sm:$0xf]
  %v642 = vld [vmem:[%s5 + $0x24] sm:$0xf]
  %v643 = vld [vmem:[%s5 + $0x28] sm:$0xf]
  %v644 = vld [vmem:[%s5 + $0x2c] sm:$0xf]
  %v645 = vld [vmem:[%s5 + $0x30] sm:$0xf]
  %v646 = vld [vmem:[%s5 + $0x34] sm:$0xf]
  %v647 = vld [vmem:[%s5 + $0x38] sm:$0xf]
  %v648 = vld [vmem:[%s5 + $0x3c] sm:$0xf]
  %v649 = vld [vmem:[%s6] sm:$0x1]
  %v651 = vlaneseq
  %v652 = vshrl.u32 %v651, 7
  %v653 = vsub.s32 0, %v652
  %v654 = vrot.slane %v649, %v653
  %v672 = vunpack.c.l.b16 %v633
  %v673 = vunpack.c.l.b16 %v634
  %v674 = vunpack.c.l.b16 %v635
  %v675 = vunpack.c.l.b16 %v636
  %v676 = vunpack.c.l.b16 %v637
  %v677 = vunpack.c.l.b16 %v638
  %v678 = vunpack.c.l.b16 %v639
  %v679 = vunpack.c.l.b16 %v640
  %v680 = vunpack.c.l.b16 %v641
  %v681 = vunpack.c.l.b16 %v642
  %v682 = vunpack.c.l.b16 %v643
  %v683 = vunpack.c.l.b16 %v644
  %v684 = vunpack.c.l.b16 %v645
  %v685 = vunpack.c.l.b16 %v646
  %v686 = vunpack.c.l.b16 %v647
  %v687 = vunpack.c.l.b16 %v648
  %v688 = vpack.c.b16 %v673, %v672
  %v689 = vpack.c.b16 %v675, %v674
  %v690 = vpack.c.b16 %v677, %v676
  %v691 = vpack.c.b16 %v679, %v678
  %v692 = vpack.c.b16 %v681, %v680
  %v693 = vpack.c.b16 %v683, %v682
  %v694 = vpack.c.b16 %v685, %v684
  %v695 = vpack.c.b16 %v687, %v686
  %704 = vmatprep.subr.bf16.mxu0 0
  %705 = vmatpush1.bf16.msra.mxu0 %v688
  %706 = vmatprep.subr.bf16.mxu0 0
  %707 = vmatpush1.bf16.msra.mxu0 %v689
  %708 = vmatprep.subr.bf16.mxu0 0
  %709 = vmatpush1.bf16.msra.mxu0 %v690
  %710 = vmatprep.subr.bf16.mxu0 0
  %711 = vmatpush1.bf16.msra.mxu0 %v691
  %712 = vmatprep.subr.bf16.mxu0 0
  %713 = vmatpush1.bf16.msra.mxu0 %v692
  %714 = vmatprep.subr.bf16.mxu0 0
  %715 = vmatpush1.bf16.msra.mxu0 %v693
  %716 = vmatprep.subr.bf16.mxu0 0
  %717 = vmatpush1.bf16.msra.mxu0 %v694
  %718 = vmatprep.subr.bf16.mxu0 0
  %719 = vmatpush1.bf16.msra.mxu0 %v695
  %720 = vmatprep.subr.bf16.mxu0 0
  %721 = vmatpush1.bf16.msra.mxu0 0
  %722 = vmatprep.subr.bf16.mxu0 0
  %723 = vmatpush1.bf16.msra.mxu0 0
  %724 = vmatprep.subr.bf16.mxu0 0
  %725 = vmatpush1.bf16.msra.mxu0 0
  %726 = vmatprep.subr.bf16.mxu0 0
  %727 = vmatpush1.bf16.msra.mxu0 0
  %728 = vmatprep.subr.bf16.mxu0 0
  %729 = vmatpush1.bf16.msra.mxu0 0
  %730 = vmatprep.subr.bf16.mxu0 0
  %731 = vmatpush1.bf16.msra.mxu0 0
  %732 = vmatprep.subr.bf16.mxu0 0
  %733 = vmatpush1.bf16.msra.mxu0 0
  %734 = vmatprep.subr.bf16.mxu0 0
  %735 = vmatpush1.bf16.msra.mxu0 0
  %736 = vmatprep.mubr.bf16.mxu0 0
  %737 = vmatmul.mubr.bf16.gmra.mrb[0].mxu0 %v620
  %v738 = vpop.f32.mrb[0].mxu0
  %v739 = vadd.f32 %v654, %v738
  %v740 = vpop.f32.mrb[0].mxu0
  %v741 = vpop.f32.mrb[0].mxu0
  %v742 = vadd.f32 %v654, %v741
  %v743 = vpop.f32.mrb[0].mxu0
  %744 = vmatprep.mubr.bf16.mxu0 0
  %745 = vmatmul.mubr.bf16.gmra.mrb[0].mxu0 %v621
  %v746 = vpop.f32.mrb[0].mxu0
  %v747 = vadd.f32 %v654, %v746
  %v748 = vpop.f32.mrb[0].mxu0
  %v749 = vpop.f32.mrb[0].mxu0
  %v750 = vadd.f32 %v654, %v749
  %v751 = vpop.f32.mrb[0].mxu0
  %752 = vmatprep.mubr.bf16.mxu0 0
  %753 = vmatmul.mubr.bf16.gmra.mrb[0].mxu0 %v622
  %v754 = vpop.f32.mrb[0].mxu0
  %v755 = vadd.f32 %v654, %v754
  %v756 = vpop.f32.mrb[0].mxu0
  %v757 = vpop.f32.mrb[0].mxu0
  %v758 = vadd.f32 %v654, %v757
  %v759 = vpop.f32.mrb[0].mxu0
  %760 = vmatprep.mubr.bf16.mxu0 0
  %761 = vmatmul.mubr.bf16.gmra.mrb[0].mxu0 %v623
  %v762 = vpop.f32.mrb[0].mxu0
  %v763 = vadd.f32 %v654, %v762
  %v764 = vpop.f32.mrb[0].mxu0
  %v765 = vpop.f32.mrb[0].mxu0
  %v766 = vadd.f32 %v654, %v765
  %v767 = vpop.f32.mrb[0].mxu0
  %768 = vmatprep.mubr.bf16.mxu0 0
  %769 = vmatmul.mubr.bf16.gmra.mrb[0].mxu0 %v624
  %v770 = vpop.f32.mrb[0].mxu0
  %v771 = vadd.f32 %v654, %v770
  %v772 = vpop.f32.mrb[0].mxu0
  %v773 = vpop.f32.mrb[0].mxu0
  %v774 = vadd.f32 %v654, %v773
  %v775 = vpop.f32.mrb[0].mxu0
  %776 = vmatprep.mubr.bf16.mxu0 0
  %777 = vmatmul.mubr.bf16.gmra.mrb[0].mxu0 %v625
  %v778 = vpop.f32.mrb[0].mxu0
  %v779 = vadd.f32 %v654, %v778
  %v780 = vpop.f32.mrb[0].mxu0
  %v781 = vpop.f32.mrb[0].mxu0
  %v782 = vadd.f32 %v654, %v781
  %v783 = vpop.f32.mrb[0].mxu0
  %784 = vmatprep.mubr.bf16.mxu0 0
  %785 = vmatmul.mubr.bf16.gmra.mrb[0].mxu0 %v626
  %v786 = vpop.f32.mrb[0].mxu0
  %v787 = vadd.f32 %v654, %v786
  %v788 = vpop.f32.mrb[0].mxu0
  %v789 = vpop.f32.mrb[0].mxu0
  %v790 = vadd.f32 %v654, %v789
  %v791 = vpop.f32.mrb[0].mxu0
  %792 = vmatprep.mubr.bf16.mxu0 0
  %793 = vmatmul.mubr.bf16.gmra.mrb[0].mxu0 %v627
  %v794 = vpop.f32.mrb[0].mxu0
  %v795 = vadd.f32 %v654, %v794
  %v796 = vpop.f32.mrb[0].mxu0
  %v797 = vpop.f32.mrb[0].mxu0
  %v798 = vadd.f32 %v654, %v797
  %v799 = vpop.f32.mrb[0].mxu0
  %800 = vmatprep.mubr.bf16.mxu0 0
  %801 = vmatmul.mubr.bf16.gmra.mrb[0].mxu0 %v628
  %v802 = vpop.f32.mrb[0].mxu0
  %v803 = vadd.f32 %v654, %v802
  %v804 = vpop.f32.mrb[0].mxu0
  %v805 = vpop.f32.mrb[0].mxu0
  %v806 = vadd.f32 %v654, %v805
  %v807 = vpop.f32.mrb[0].mxu0
  %808 = vmatprep.mubr.bf16.mxu0 0
  %809 = vmatmul.mubr.bf16.gmra.mrb[0].mxu0 %v629
  %v810 = vpop.f32.mrb[0].mxu0
  %v811 = vadd.f32 %v654, %v810
  %v812 = vpop.f32.mrb[0].mxu0
  %v813 = vpop.f32.mrb[0].mxu0
  %v814 = vadd.f32 %v654, %v813
  %v815 = vpop.f32.mrb[0].mxu0
  %816 = vmatprep.mubr.bf16.mxu0 0
  %817 = vmatmul.mubr.bf16.gmra.mrb[0].mxu0 %v630
  %v818 = vpop.f32.mrb[0].mxu0
  %v819 = vadd.f32 %v654, %v818
  %v820 = vpop.f32.mrb[0].mxu0
  %v821 = vpop.f32.mrb[0].mxu0
  %v822 = vadd.f32 %v654, %v821
  %v823 = vpop.f32.mrb[0].mxu0
  %824 = vmatprep.mubr.bf16.mxu0 0
  %825 = vmatmul.mubr.bf16.gmra.mrb[0].mxu0 %v631
  %v826 = vpop.f32.mrb[0].mxu0
  %v827 = vadd.f32 %v654, %v826
  %v828 = vpop.f32.mrb[0].mxu0
  %v829 = vpop.f32.mrb[0].mxu0
  %v830 = vadd.f32 %v654, %v829
  %v831 = vpop.f32.mrb[0].mxu0
  %832 = vmatprep.mubr.bf16.mxu0 0
  %833 = vmatmul.mubr.bf16.gmra.mrb[0].mxu0 %v632
  %v834 = vpop.f32.mrb[0].mxu0
  %v835 = vadd.f32 %v654, %v834
  %v836 = vpop.f32.mrb[0].mxu0
  %v837 = vpop.f32.mrb[0].mxu0
  %v838 = vadd.f32 %v654, %v837
  %v839 = vpop.f32.mrb[0].mxu0
  %840 = vdwg.mxu0
  %v841 = vlaneseq
  %v842 = vshrl.u32 %v841, 7
  %v843 = vadd.s32 %v842, 8
  %v844 = vadd.s32 %v842, 16
  %v845 = vadd.s32 %v842, 24
  %v846 = vadd.s32 %v842, 32
  %v847 = vadd.s32 %v842, 40
  %v848 = vadd.s32 %v842, 48
  %v849 = vadd.s32 %v842, 56
  %v850 = vadd.s32 %v842, 64
  %v851 = vadd.s32 %v842, 72
  %v852 = vadd.s32 %v842, 80
  %v853 = vadd.s32 %v842, 88
  %v854 = vadd.s32 %v842, 96
  %v855 = vadd.s32 %v842, 104
  %v856 = vadd.s32 %v842, 112
  %v857 = vadd.s32 %v842, 120
  %v858 = vadd.s32 %v842, 128
  %v859 = vadd.s32 %v842, 136
  %v860 = vadd.s32 %v842, 144
  %v861 = vadd.s32 %v842, 152
  %v862 = vadd.s32 %v842, 160
  %v863 = vadd.s32 %v842, 168
  %v864 = vadd.s32 %v842, 176
  %v865 = vadd.s32 %v842, 184
  %v866 = vadd.s32 %v842, 192
  %v867 = vadd.s32 %v842, 200
  %vm868 = vcmp.lt.s32.totalorder %v842, 203
  %vm869 = vcmp.lt.s32.totalorder %v843, 203
  %vm870 = vcmp.lt.s32.totalorder %v844, 203
  %vm871 = vcmp.lt.s32.totalorder %v845, 203
  %vm872 = vcmp.lt.s32.totalorder %v846, 203
  %vm873 = vcmp.lt.s32.totalorder %v847, 203
  %vm874 = vcmp.lt.s32.totalorder %v848, 203
  %vm875 = vcmp.lt.s32.totalorder %v849, 203
  %vm876 = vcmp.lt.s32.totalorder %v850, 203
  %vm877 = vcmp.lt.s32.totalorder %v851, 203
  %vm878 = vcmp.lt.s32.totalorder %v852, 203
  %vm879 = vcmp.lt.s32.totalorder %v853, 203
  %vm880 = vcmp.lt.s32.totalorder %v854, 203
  %vm881 = vcmp.lt.s32.totalorder %v855, 203
  %vm882 = vcmp.lt.s32.totalorder %v856, 203
  %vm883 = vcmp.lt.s32.totalorder %v857, 203
  %vm884 = vcmp.lt.s32.totalorder %v858, 203
  %vm885 = vcmp.lt.s32.totalorder %v859, 203
  %vm886 = vcmp.lt.s32.totalorder %v860, 203
  %vm887 = vcmp.lt.s32.totalorder %v861, 203
  %vm888 = vcmp.lt.s32.totalorder %v862, 203
  %vm889 = vcmp.lt.s32.totalorder %v863, 203
  %vm890 = vcmp.lt.s32.totalorder %v864, 203
  %vm891 = vcmp.lt.s32.totalorder %v865, 203
  %vm892 = vcmp.lt.s32.totalorder %v866, 203
  %vm893 = vcmp.lt.s32.totalorder %v867, 203
  %v894 = vsel %vm868, 1, 0
  %v895 = vsel %vm869, 1, 0
  %v896 = vsel %vm870, 1, 0
  %v897 = vsel %vm871, 1, 0
  %v898 = vsel %vm872, 1, 0
  %v899 = vsel %vm873, 1, 0
  %v900 = vsel %vm874, 1, 0
  %v901 = vsel %vm875, 1, 0
  %v902 = vsel %vm876, 1, 0
  %v903 = vsel %vm877, 1, 0
  %v904 = vsel %vm878, 1, 0
  %v905 = vsel %vm879, 1, 0
  %v906 = vsel %vm880, 1, 0
  %v907 = vsel %vm881, 1, 0
  %v908 = vsel %vm882, 1, 0
  %v909 = vsel %vm883, 1, 0
  %v910 = vsel %vm884, 1, 0
  %v911 = vsel %vm885, 1, 0
  %v912 = vsel %vm886, 1, 0
  %v913 = vsel %vm887, 1, 0
  %v914 = vsel %vm888, 1, 0
  %v915 = vsel %vm889, 1, 0
  %v916 = vsel %vm890, 1, 0
  %v917 = vsel %vm891, 1, 0
  %v918 = vsel %vm892, 1, 0
  %v919 = vsel %vm893, 1, 0
  %vm920 = vcmp.eq.s32.totalorder %v894, 1
  %vm921 = vcmp.eq.s32.totalorder %v895, 1
  %vm922 = vcmp.eq.s32.totalorder %v896, 1
  %vm923 = vcmp.eq.s32.totalorder %v897, 1
  %vm924 = vcmp.eq.s32.totalorder %v898, 1
  %vm925 = vcmp.eq.s32.totalorder %v899, 1
  %vm926 = vcmp.eq.s32.totalorder %v900, 1
  %vm927 = vcmp.eq.s32.totalorder %v901, 1
  %vm928 = vcmp.eq.s32.totalorder %v902, 1
  %vm929 = vcmp.eq.s32.totalorder %v903, 1
  %vm930 = vcmp.eq.s32.totalorder %v904, 1
  %vm931 = vcmp.eq.s32.totalorder %v905, 1
  %vm932 = vcmp.eq.s32.totalorder %v906, 1
  %vm933 = vcmp.eq.s32.totalorder %v907, 1
  %vm934 = vcmp.eq.s32.totalorder %v908, 1
  %vm935 = vcmp.eq.s32.totalorder %v909, 1
  %vm936 = vcmp.eq.s32.totalorder %v910, 1
  %vm937 = vcmp.eq.s32.totalorder %v911, 1
  %vm938 = vcmp.eq.s32.totalorder %v912, 1
  %vm939 = vcmp.eq.s32.totalorder %v913, 1
  %vm940 = vcmp.eq.s32.totalorder %v914, 1
  %vm941 = vcmp.eq.s32.totalorder %v915, 1
  %vm942 = vcmp.eq.s32.totalorder %v916, 1
  %vm943 = vcmp.eq.s32.totalorder %v917, 1
  %vm944 = vcmp.eq.s32.totalorder %v918, 1
  %vm945 = vcmp.eq.s32.totalorder %v919, 1
  %v946 = vsel %vm920, %v739, 0.0
  %v947 = vsel %vm921, %v742, 0.0
  %v948 = vsel %vm922, %v747, 0.0
  %v949 = vsel %vm923, %v750, 0.0
  %v950 = vsel %vm924, %v755, 0.0
  %v951 = vsel %vm925, %v758, 0.0
  %v952 = vsel %vm926, %v763, 0.0
  %v953 = vsel %vm927, %v766, 0.0
  %v954 = vsel %vm928, %v771, 0.0
  %v955 = vsel %vm929, %v774, 0.0
  %v956 = vsel %vm930, %v779, 0.0
  %v957 = vsel %vm931, %v782, 0.0
  %v958 = vsel %vm932, %v787, 0.0
  %v959 = vsel %vm933, %v790, 0.0
  %v960 = vsel %vm934, %v795, 0.0
  %v961 = vsel %vm935, %v798, 0.0
  %v962 = vsel %vm936, %v803, 0.0
  %v963 = vsel %vm937, %v806, 0.0
  %v964 = vsel %vm938, %v811, 0.0
  %v965 = vsel %vm939, %v814, 0.0
  %v966 = vsel %vm940, %v819, 0.0
  %v967 = vsel %vm941, %v822, 0.0
  %v968 = vsel %vm942, %v827, 0.0
  %v969 = vsel %vm943, %v830, 0.0
  %v970 = vsel %vm944, %v835, 0.0
  %v971 = vsel %vm945, %v838, 0.0
  %v972 = vadd.f32 %v946, %v947
  %v973 = vadd.f32 %v972, %v948
  %v974 = vadd.f32 %v973, %v949
  %v975 = vadd.f32 %v974, %v950
  %v976 = vadd.f32 %v975, %v951
  %v977 = vadd.f32 %v976, %v952
  %v978 = vadd.f32 %v977, %v953
  %v979 = vadd.f32 %v978, %v954
  %v980 = vadd.f32 %v979, %v955
  %v981 = vadd.f32 %v980, %v956
  %v982 = vadd.f32 %v981, %v957
  %v983 = vadd.f32 %v982, %v958
  %v984 = vadd.f32 %v983, %v959
  %v985 = vadd.f32 %v984, %v960
  %v986 = vadd.f32 %v985, %v961
  %v987 = vadd.f32 %v986, %v962
  %v988 = vadd.f32 %v987, %v963
  %v989 = vadd.f32 %v988, %v964
  %v990 = vadd.f32 %v989, %v965
  %v991 = vadd.f32 %v990, %v966
  %v992 = vadd.f32 %v991, %v967
  %v993 = vadd.f32 %v992, %v968
  %v994 = vadd.f32 %v993, %v969
  %v995 = vadd.f32 %v994, %v970
  %v996 = vadd.f32 %v995, %v971
  %v997 = vrot.slane %v996, 4
  %v998 = vadd.f32 %v996, %v997
  %v999 = vrot.slane %v998, 2
  %v1000 = vadd.f32 %v998, %v999
  %v1001 = vrot.slane %v1000, 1
  %v1002 = vadd.f32 %v1000, %v1001
  %v1003 = vmul.f32 %v1002, 0.0049261083
  %v1004 = vmul.f32 %v946, %v946
  %v1005 = vmul.f32 %v947, %v947
  %v1006 = vmul.f32 %v948, %v948
  %v1007 = vmul.f32 %v949, %v949
  %v1008 = vmul.f32 %v950, %v950
  %v1009 = vmul.f32 %v951, %v951
  %v1010 = vmul.f32 %v952, %v952
  %v1011 = vmul.f32 %v953, %v953
  %v1012 = vmul.f32 %v954, %v954
  %v1013 = vmul.f32 %v955, %v955
  %v1014 = vmul.f32 %v956, %v956
  %v1015 = vmul.f32 %v957, %v957
  %v1016 = vmul.f32 %v958, %v958
  %v1017 = vmul.f32 %v959, %v959
  %v1018 = vmul.f32 %v960, %v960
  %v1019 = vmul.f32 %v961, %v961
  %v1020 = vmul.f32 %v962, %v962
  %v1021 = vmul.f32 %v963, %v963
  %v1022 = vmul.f32 %v964, %v964
  %v1023 = vmul.f32 %v965, %v965
  %v1024 = vmul.f32 %v966, %v966
  %v1025 = vmul.f32 %v967, %v967
  %v1026 = vmul.f32 %v968, %v968
  %v1027 = vmul.f32 %v969, %v969
  %v1028 = vmul.f32 %v970, %v970
  %v1029 = vmul.f32 %v971, %v971
  %v1030 = vadd.f32 %v1004, %v1005
  %v1031 = vadd.f32 %v1030, %v1006
  %v1032 = vadd.f32 %v1031, %v1007
  %v1033 = vadd.f32 %v1032, %v1008
  %v1034 = vadd.f32 %v1033, %v1009
  %v1035 = vadd.f32 %v1034, %v1010
  %v1036 = vadd.f32 %v1035, %v1011
  %v1037 = vadd.f32 %v1036, %v1012
  %v1038 = vadd.f32 %v1037, %v1013
  %v1039 = vadd.f32 %v1038, %v1014
  %v1040 = vadd.f32 %v1039, %v1015
  %v1041 = vadd.f32 %v1040, %v1016
  %v1042 = vadd.f32 %v1041, %v1017
  %v1043 = vadd.f32 %v1042, %v1018
  %v1044 = vadd.f32 %v1043, %v1019
  %v1045 = vadd.f32 %v1044, %v1020
  %v1046 = vadd.f32 %v1045, %v1021
  %v1047 = vadd.f32 %v1046, %v1022
  %v1048 = vadd.f32 %v1047, %v1023
  %v1049 = vadd.f32 %v1048, %v1024
  %v1050 = vadd.f32 %v1049, %v1025
  %v1051 = vadd.f32 %v1050, %v1026
  %v1052 = vadd.f32 %v1051, %v1027
  %v1053 = vadd.f32 %v1052, %v1028
  %v1054 = vadd.f32 %v1053, %v1029
  %v1055 = vrot.slane %v1054, 4
  %v1056 = vadd.f32 %v1054, %v1055
  %v1057 = vrot.slane %v1056, 2
  %v1058 = vadd.f32 %v1056, %v1057
  %v1059 = vrot.slane %v1058, 1
  %v1060 = vadd.f32 %v1058, %v1059
  %v1061 = vmul.f32 %v1060, 0.0049261083
  %v1062 = vmul.f32 %v1003, %v1003
  %v1063 = vsub.f32 %v1061, %v1062
  %v1064 = vmax.f32 %v1063, 0.0
  %v1065 = vld [vmem:[%s7] sm:$0x1]
  %v1066 = vadd.f32 %v1064, 1e-05
  %v1067 = vrsqrt.pop %v1066
  %v1068 = vmul.f32 %v1065, %v1067
  %v1069 = vld [vmem:[%s8] sm:$0x1]
  %v1070 = vmul.f32 %v1003, %v1068
  %v1071 = vsub.f32 %v1069, %v1070
  %v1073 = vlaneseq
  %v1074 = vshrl.u32 %v1073, 7
  %v1075 = vsub.s32 0, %v1074
  %v1076 = vrot.slane %v1068, %v1075
  %v1078 = vmul.f32 %v739, %v1076
  %v1079 = vmul.f32 %v742, %v1076
  %v1080 = vmul.f32 %v747, %v1076
  %v1081 = vmul.f32 %v750, %v1076
  %v1082 = vmul.f32 %v755, %v1076
  %v1083 = vmul.f32 %v758, %v1076
  %v1084 = vmul.f32 %v763, %v1076
  %v1085 = vmul.f32 %v766, %v1076
  %v1086 = vmul.f32 %v771, %v1076
  %v1087 = vmul.f32 %v774, %v1076
  %v1088 = vmul.f32 %v779, %v1076
  %v1089 = vmul.f32 %v782, %v1076
  %v1090 = vmul.f32 %v787, %v1076
  %v1091 = vmul.f32 %v790, %v1076
  %v1092 = vmul.f32 %v795, %v1076
  %v1093 = vmul.f32 %v798, %v1076
  %v1094 = vmul.f32 %v803, %v1076
  %v1095 = vmul.f32 %v806, %v1076
  %v1096 = vmul.f32 %v811, %v1076
  %v1097 = vmul.f32 %v814, %v1076
  %v1098 = vmul.f32 %v819, %v1076
  %v1099 = vmul.f32 %v822, %v1076
  %v1100 = vmul.f32 %v827, %v1076
  %v1101 = vmul.f32 %v830, %v1076
  %v1102 = vmul.f32 %v835, %v1076
  %v1103 = vmul.f32 %v838, %v1076
  %v1105 = vlaneseq
  %v1106 = vshrl.u32 %v1105, 7
  %v1107 = vsub.s32 0, %v1106
  %v1108 = vrot.slane %v1071, %v1107
  %v1110 = vadd.f32 %v1078, %v1108
  %v1111 = vadd.f32 %v1079, %v1108
  %v1112 = vadd.f32 %v1080, %v1108
  %v1113 = vadd.f32 %v1081, %v1108
  %v1114 = vadd.f32 %v1082, %v1108
  %v1115 = vadd.f32 %v1083, %v1108
  %v1116 = vadd.f32 %v1084, %v1108
  %v1117 = vadd.f32 %v1085, %v1108
  %v1118 = vadd.f32 %v1086, %v1108
  %v1119 = vadd.f32 %v1087, %v1108
  %v1120 = vadd.f32 %v1088, %v1108
  %v1121 = vadd.f32 %v1089, %v1108
  %v1122 = vadd.f32 %v1090, %v1108
  %v1123 = vadd.f32 %v1091, %v1108
  %v1124 = vadd.f32 %v1092, %v1108
  %v1125 = vadd.f32 %v1093, %v1108
  %v1126 = vadd.f32 %v1094, %v1108
  %v1127 = vadd.f32 %v1095, %v1108
  %v1128 = vadd.f32 %v1096, %v1108
  %v1129 = vadd.f32 %v1097, %v1108
  %v1130 = vadd.f32 %v1098, %v1108
  %v1131 = vadd.f32 %v1099, %v1108
  %v1132 = vadd.f32 %v1100, %v1108
  %v1133 = vadd.f32 %v1101, %v1108
  %v1134 = vadd.f32 %v1102, %v1108
  %v1135 = vadd.f32 %v1103, %v1108
  %vm1136 = vcmp.gt.f32.partialorder %v1110, 0.0
  %vm1137 = vcmp.gt.f32.partialorder %v1111, 0.0
  %vm1138 = vcmp.gt.f32.partialorder %v1112, 0.0
  %vm1139 = vcmp.gt.f32.partialorder %v1113, 0.0
  %vm1140 = vcmp.gt.f32.partialorder %v1114, 0.0
  %vm1141 = vcmp.gt.f32.partialorder %v1115, 0.0
  %vm1142 = vcmp.gt.f32.partialorder %v1116, 0.0
  %vm1143 = vcmp.gt.f32.partialorder %v1117, 0.0
  %vm1144 = vcmp.gt.f32.partialorder %v1118, 0.0
  %vm1145 = vcmp.gt.f32.partialorder %v1119, 0.0
  %vm1146 = vcmp.gt.f32.partialorder %v1120, 0.0
  %vm1147 = vcmp.gt.f32.partialorder %v1121, 0.0
  %vm1148 = vcmp.gt.f32.partialorder %v1122, 0.0
  %vm1149 = vcmp.gt.f32.partialorder %v1123, 0.0
  %vm1150 = vcmp.gt.f32.partialorder %v1124, 0.0
  %vm1151 = vcmp.gt.f32.partialorder %v1125, 0.0
  %vm1152 = vcmp.gt.f32.partialorder %v1126, 0.0
  %vm1153 = vcmp.gt.f32.partialorder %v1127, 0.0
  %vm1154 = vcmp.gt.f32.partialorder %v1128, 0.0
  %vm1155 = vcmp.gt.f32.partialorder %v1129, 0.0
  %vm1156 = vcmp.gt.f32.partialorder %v1130, 0.0
  %vm1157 = vcmp.gt.f32.partialorder %v1131, 0.0
  %vm1158 = vcmp.gt.f32.partialorder %v1132, 0.0
  %vm1159 = vcmp.gt.f32.partialorder %v1133, 0.0
  %vm1160 = vcmp.gt.f32.partialorder %v1134, 0.0
  %vm1161 = vcmp.gt.f32.partialorder %v1135, 0.0
  %v1162 = vmul.f32 %v1110, 0.3
  %v1163 = vmul.f32 %v1111, 0.3
  %v1164 = vmul.f32 %v1112, 0.3
  %v1165 = vmul.f32 %v1113, 0.3
  %v1166 = vmul.f32 %v1114, 0.3
  %v1167 = vmul.f32 %v1115, 0.3
  %v1168 = vmul.f32 %v1116, 0.3
  %v1169 = vmul.f32 %v1117, 0.3
  %v1170 = vmul.f32 %v1118, 0.3
  %v1171 = vmul.f32 %v1119, 0.3
  %v1172 = vmul.f32 %v1120, 0.3
  %v1173 = vmul.f32 %v1121, 0.3
  %v1174 = vmul.f32 %v1122, 0.3
  %v1175 = vmul.f32 %v1123, 0.3
  %v1176 = vmul.f32 %v1124, 0.3
  %v1177 = vmul.f32 %v1125, 0.3
  %v1178 = vmul.f32 %v1126, 0.3
  %v1179 = vmul.f32 %v1127, 0.3
  %v1180 = vmul.f32 %v1128, 0.3
  %v1181 = vmul.f32 %v1129, 0.3
  %v1182 = vmul.f32 %v1130, 0.3
  %v1183 = vmul.f32 %v1131, 0.3
  %v1184 = vmul.f32 %v1132, 0.3
  %v1185 = vmul.f32 %v1133, 0.3
  %v1186 = vmul.f32 %v1134, 0.3
  %v1187 = vmul.f32 %v1135, 0.3
  %v1188 = vsel %vm1136, %v1110, %v1162
  %v1189 = vsel %vm1137, %v1111, %v1163
  %v1190 = vsel %vm1138, %v1112, %v1164
  %v1191 = vsel %vm1139, %v1113, %v1165
  %v1192 = vsel %vm1140, %v1114, %v1166
  %v1193 = vsel %vm1141, %v1115, %v1167
  %v1194 = vsel %vm1142, %v1116, %v1168
  %v1195 = vsel %vm1143, %v1117, %v1169
  %v1196 = vsel %vm1144, %v1118, %v1170
  %v1197 = vsel %vm1145, %v1119, %v1171
  %v1198 = vsel %vm1146, %v1120, %v1172
  %v1199 = vsel %vm1147, %v1121, %v1173
  %v1200 = vsel %vm1148, %v1122, %v1174
  %v1201 = vsel %vm1149, %v1123, %v1175
  %v1202 = vsel %vm1150, %v1124, %v1176
  %v1203 = vsel %vm1151, %v1125, %v1177
  %v1204 = vsel %vm1152, %v1126, %v1178
  %v1205 = vsel %vm1153, %v1127, %v1179
  %v1206 = vsel %vm1154, %v1128, %v1180
  %v1207 = vsel %vm1155, %v1129, %v1181
  %v1208 = vsel %vm1156, %v1130, %v1182
  %v1209 = vsel %vm1157, %v1131, %v1183
  %v1210 = vsel %vm1158, %v1132, %v1184
  %v1211 = vsel %vm1159, %v1133, %v1185
  %v1212 = vsel %vm1160, %v1134, %v1186
  %v1213 = vsel %vm1161, %v1135, %v1187
  %v1214 = vpack.c.bf16 %v1189, %v1188
  %v1215 = vpack.c.bf16 %v1191, %v1190
  %v1216 = vpack.c.bf16 %v1193, %v1192
  %v1217 = vpack.c.bf16 %v1195, %v1194
  %v1218 = vpack.c.bf16 %v1197, %v1196
  %v1219 = vpack.c.bf16 %v1199, %v1198
  %v1220 = vpack.c.bf16 %v1201, %v1200
  %v1221 = vpack.c.bf16 %v1203, %v1202
  %v1222 = vpack.c.bf16 %v1205, %v1204
  %v1223 = vpack.c.bf16 %v1207, %v1206
  %v1224 = vpack.c.bf16 %v1209, %v1208
  %v1225 = vpack.c.bf16 %v1211, %v1210
  %v1226 = vpack.c.bf16 %v1213, %v1212
  %v1227 = vld [vmem:[%s9] sm:$0xf]
  %v1228 = vld [vmem:[%s9 + $0x4] sm:$0xf]
  %v1229 = vld [vmem:[%s9 + $0x8] sm:$0xf]
  %v1230 = vld [vmem:[%s9 + $0xc] sm:$0xf]
  %v1231 = vld [vmem:[%s9 + $0x10] sm:$0xf]
  %v1232 = vld [vmem:[%s9 + $0x14] sm:$0xf]
  %v1233 = vld [vmem:[%s9 + $0x18] sm:$0xf]
  %v1234 = vld [vmem:[%s9 + $0x1c] sm:$0xf]
  %v1235 = vld [vmem:[%s9 + $0x20] sm:$0xf]
  %v1236 = vld [vmem:[%s9 + $0x24] sm:$0xf]
  %v1237 = vld [vmem:[%s9 + $0x28] sm:$0xf]
  %v1238 = vld [vmem:[%s9 + $0x2c] sm:$0xf]
  %v1239 = vld [vmem:[%s9 + $0x30] sm:$0xf]
  %v1240 = vld [vmem:[%s9 + $0x34] sm:$0xf]
  %v1241 = vld [vmem:[%s9 + $0x38] sm:$0xf]
  %v1242 = vld [vmem:[%s9 + $0x3c] sm:$0xf]
  %v1243 = vld [vmem:[%s10] sm:$0x1]
  %v1245 = vlaneseq
  %v1246 = vshrl.u32 %v1245, 7
  %v1247 = vsub.s32 0, %v1246
  %v1248 = vrot.slane %v1243, %v1247
  %v1266 = vunpack.c.l.b16 %v1227
  %v1267 = vunpack.c.l.b16 %v1228
  %v1268 = vunpack.c.l.b16 %v1229
  %v1269 = vunpack.c.l.b16 %v1230
  %v1270 = vunpack.c.l.b16 %v1231
  %v1271 = vunpack.c.l.b16 %v1232
  %v1272 = vunpack.c.l.b16 %v1233
  %v1273 = vunpack.c.l.b16 %v1234
  %v1274 = vunpack.c.l.b16 %v1235
  %v1275 = vunpack.c.l.b16 %v1236
  %v1276 = vunpack.c.l.b16 %v1237
  %v1277 = vunpack.c.l.b16 %v1238
  %v1278 = vunpack.c.l.b16 %v1239
  %v1279 = vunpack.c.l.b16 %v1240
  %v1280 = vunpack.c.l.b16 %v1241
  %v1281 = vunpack.c.l.b16 %v1242
  %v1282 = vpack.c.b16 %v1267, %v1266
  %v1283 = vpack.c.b16 %v1269, %v1268
  %v1284 = vpack.c.b16 %v1271, %v1270
  %v1285 = vpack.c.b16 %v1273, %v1272
  %v1286 = vpack.c.b16 %v1275, %v1274
  %v1287 = vpack.c.b16 %v1277, %v1276
  %v1288 = vpack.c.b16 %v1279, %v1278
  %v1289 = vpack.c.b16 %v1281, %v1280
  %1298 = vmatprep.subr.bf16.mxu0 0
  %1299 = vmatpush1.bf16.msra.mxu0 %v1282
  %1300 = vmatprep.subr.bf16.mxu0 0
  %1301 = vmatpush1.bf16.msra.mxu0 %v1283
  %1302 = vmatprep.subr.bf16.mxu0 0
  %1303 = vmatpush1.bf16.msra.mxu0 %v1284
  %1304 = vmatprep.subr.bf16.mxu0 0
  %1305 = vmatpush1.bf16.msra.mxu0 %v1285
  %1306 = vmatprep.subr.bf16.mxu0 0
  %1307 = vmatpush1.bf16.msra.mxu0 %v1286
  %1308 = vmatprep.subr.bf16.mxu0 0
  %1309 = vmatpush1.bf16.msra.mxu0 %v1287
  %1310 = vmatprep.subr.bf16.mxu0 0
  %1311 = vmatpush1.bf16.msra.mxu0 %v1288
  %1312 = vmatprep.subr.bf16.mxu0 0
  %1313 = vmatpush1.bf16.msra.mxu0 %v1289
  %1314 = vmatprep.subr.bf16.mxu0 0
  %1315 = vmatpush1.bf16.msra.mxu0 0
  %1316 = vmatprep.subr.bf16.mxu0 0
  %1317 = vmatpush1.bf16.msra.mxu0 0
  %1318 = vmatprep.subr.bf16.mxu0 0
  %1319 = vmatpush1.bf16.msra.mxu0 0
  %1320 = vmatprep.subr.bf16.mxu0 0
  %1321 = vmatpush1.bf16.msra.mxu0 0
  %1322 = vmatprep.subr.bf16.mxu0 0
  %1323 = vmatpush1.bf16.msra.mxu0 0
  %1324 = vmatprep.subr.bf16.mxu0 0
  %1325 = vmatpush1.bf16.msra.mxu0 0
  %1326 = vmatprep.subr.bf16.mxu0 0
  %1327 = vmatpush1.bf16.msra.mxu0 0
  %1328 = vmatprep.subr.bf16.mxu0 0
  %1329 = vmatpush1.bf16.msra.mxu0 0
  %1330 = vmatprep.mubr.bf16.mxu0 0
  %1331 = vmatmul.mubr.bf16.gmra.mrb[0].mxu0 %v1214
  %v1332 = vpop.f32.mrb[0].mxu0
  %v1333 = vadd.f32 %v1248, %v1332
  %v1334 = vpop.f32.mrb[0].mxu0
  %v1335 = vpop.f32.mrb[0].mxu0
  %v1336 = vadd.f32 %v1248, %v1335
  %v1337 = vpop.f32.mrb[0].mxu0
  %1338 = vmatprep.mubr.bf16.mxu0 0
  %1339 = vmatmul.mubr.bf16.gmra.mrb[0].mxu0 %v1215
  %v1340 = vpop.f32.mrb[0].mxu0
  %v1341 = vadd.f32 %v1248, %v1340
  %v1342 = vpop.f32.mrb[0].mxu0
  %v1343 = vpop.f32.mrb[0].mxu0
  %v1344 = vadd.f32 %v1248, %v1343
  %v1345 = vpop.f32.mrb[0].mxu0
  %1346 = vmatprep.mubr.bf16.mxu0 0
  %1347 = vmatmul.mubr.bf16.gmra.mrb[0].mxu0 %v1216
  %v1348 = vpop.f32.mrb[0].mxu0
  %v1349 = vadd.f32 %v1248, %v1348
  %v1350 = vpop.f32.mrb[0].mxu0
  %v1351 = vpop.f32.mrb[0].mxu0
  %v1352 = vadd.f32 %v1248, %v1351
  %v1353 = vpop.f32.mrb[0].mxu0
  %1354 = vmatprep.mubr.bf16.mxu0 0
  %1355 = vmatmul.mubr.bf16.gmra.mrb[0].mxu0 %v1217
  %v1356 = vpop.f32.mrb[0].mxu0
  %v1357 = vadd.f32 %v1248, %v1356
  %v1358 = vpop.f32.mrb[0].mxu0
  %v1359 = vpop.f32.mrb[0].mxu0
  %v1360 = vadd.f32 %v1248, %v1359
  %v1361 = vpop.f32.mrb[0].mxu0
  %1362 = vmatprep.mubr.bf16.mxu0 0
  %1363 = vmatmul.mubr.bf16.gmra.mrb[0].mxu0 %v1218
  %v1364 = vpop.f32.mrb[0].mxu0
  %v1365 = vadd.f32 %v1248, %v1364
  %v1366 = vpop.f32.mrb[0].mxu0
  %v1367 = vpop.f32.mrb[0].mxu0
  %v1368 = vadd.f32 %v1248, %v1367
  %v1369 = vpop.f32.mrb[0].mxu0
  %1370 = vmatprep.mubr.bf16.mxu0 0
  %1371 = vmatmul.mubr.bf16.gmra.mrb[0].mxu0 %v1219
  %v1372 = vpop.f32.mrb[0].mxu0
  %v1373 = vadd.f32 %v1248, %v1372
  %v1374 = vpop.f32.mrb[0].mxu0
  %v1375 = vpop.f32.mrb[0].mxu0
  %v1376 = vadd.f32 %v1248, %v1375
  %v1377 = vpop.f32.mrb[0].mxu0
  %1378 = vmatprep.mubr.bf16.mxu0 0
  %1379 = vmatmul.mubr.bf16.gmra.mrb[0].mxu0 %v1220
  %v1380 = vpop.f32.mrb[0].mxu0
  %v1381 = vadd.f32 %v1248, %v1380
  %v1382 = vpop.f32.mrb[0].mxu0
  %v1383 = vpop.f32.mrb[0].mxu0
  %v1384 = vadd.f32 %v1248, %v1383
  %v1385 = vpop.f32.mrb[0].mxu0
  %1386 = vmatprep.mubr.bf16.mxu0 0
  %1387 = vmatmul.mubr.bf16.gmra.mrb[0].mxu0 %v1221
  %v1388 = vpop.f32.mrb[0].mxu0
  %v1389 = vadd.f32 %v1248, %v1388
  %v1390 = vpop.f32.mrb[0].mxu0
  %v1391 = vpop.f32.mrb[0].mxu0
  %v1392 = vadd.f32 %v1248, %v1391
  %v1393 = vpop.f32.mrb[0].mxu0
  %1394 = vmatprep.mubr.bf16.mxu0 0
  %1395 = vmatmul.mubr.bf16.gmra.mrb[0].mxu0 %v1222
  %v1396 = vpop.f32.mrb[0].mxu0
  %v1397 = vadd.f32 %v1248, %v1396
  %v1398 = vpop.f32.mrb[0].mxu0
  %v1399 = vpop.f32.mrb[0].mxu0
  %v1400 = vadd.f32 %v1248, %v1399
  %v1401 = vpop.f32.mrb[0].mxu0
  %1402 = vmatprep.mubr.bf16.mxu0 0
  %1403 = vmatmul.mubr.bf16.gmra.mrb[0].mxu0 %v1223
  %v1404 = vpop.f32.mrb[0].mxu0
  %v1405 = vadd.f32 %v1248, %v1404
  %v1406 = vpop.f32.mrb[0].mxu0
  %v1407 = vpop.f32.mrb[0].mxu0
  %v1408 = vadd.f32 %v1248, %v1407
  %v1409 = vpop.f32.mrb[0].mxu0
  %1410 = vmatprep.mubr.bf16.mxu0 0
  %1411 = vmatmul.mubr.bf16.gmra.mrb[0].mxu0 %v1224
  %v1412 = vpop.f32.mrb[0].mxu0
  %v1413 = vadd.f32 %v1248, %v1412
  %v1414 = vpop.f32.mrb[0].mxu0
  %v1415 = vpop.f32.mrb[0].mxu0
  %v1416 = vadd.f32 %v1248, %v1415
  %v1417 = vpop.f32.mrb[0].mxu0
  %1418 = vmatprep.mubr.bf16.mxu0 0
  %1419 = vmatmul.mubr.bf16.gmra.mrb[0].mxu0 %v1225
  %v1420 = vpop.f32.mrb[0].mxu0
  %v1421 = vadd.f32 %v1248, %v1420
  %v1422 = vpop.f32.mrb[0].mxu0
  %v1423 = vpop.f32.mrb[0].mxu0
  %v1424 = vadd.f32 %v1248, %v1423
  %v1425 = vpop.f32.mrb[0].mxu0
  %1426 = vmatprep.mubr.bf16.mxu0 0
  %1427 = vmatmul.mubr.bf16.gmra.mrb[0].mxu0 %v1226
  %v1428 = vpop.f32.mrb[0].mxu0
  %v1429 = vadd.f32 %v1248, %v1428
  %v1430 = vpop.f32.mrb[0].mxu0
  %v1431 = vpop.f32.mrb[0].mxu0
  %v1432 = vadd.f32 %v1248, %v1431
  %v1433 = vpop.f32.mrb[0].mxu0
  %1434 = vdwg.mxu0
  %v1435 = vsel %vm920, %v1333, 0.0
  %v1436 = vsel %vm921, %v1336, 0.0
  %v1437 = vsel %vm922, %v1341, 0.0
  %v1438 = vsel %vm923, %v1344, 0.0
  %v1439 = vsel %vm924, %v1349, 0.0
  %v1440 = vsel %vm925, %v1352, 0.0
  %v1441 = vsel %vm926, %v1357, 0.0
  %v1442 = vsel %vm927, %v1360, 0.0
  %v1443 = vsel %vm928, %v1365, 0.0
  %v1444 = vsel %vm929, %v1368, 0.0
  %v1445 = vsel %vm930, %v1373, 0.0
  %v1446 = vsel %vm931, %v1376, 0.0
  %v1447 = vsel %vm932, %v1381, 0.0
  %v1448 = vsel %vm933, %v1384, 0.0
  %v1449 = vsel %vm934, %v1389, 0.0
  %v1450 = vsel %vm935, %v1392, 0.0
  %v1451 = vsel %vm936, %v1397, 0.0
  %v1452 = vsel %vm937, %v1400, 0.0
  %v1453 = vsel %vm938, %v1405, 0.0
  %v1454 = vsel %vm939, %v1408, 0.0
  %v1455 = vsel %vm940, %v1413, 0.0
  %v1456 = vsel %vm941, %v1416, 0.0
  %v1457 = vsel %vm942, %v1421, 0.0
  %v1458 = vsel %vm943, %v1424, 0.0
  %v1459 = vsel %vm944, %v1429, 0.0
  %v1460 = vsel %vm945, %v1432, 0.0
  %v1461 = vadd.f32 %v1435, %v1436
  %v1462 = vadd.f32 %v1461, %v1437
  %v1463 = vadd.f32 %v1462, %v1438
  %v1464 = vadd.f32 %v1463, %v1439
  %v1465 = vadd.f32 %v1464, %v1440
  %v1466 = vadd.f32 %v1465, %v1441
  %v1467 = vadd.f32 %v1466, %v1442
  %v1468 = vadd.f32 %v1467, %v1443
  %v1469 = vadd.f32 %v1468, %v1444
  %v1470 = vadd.f32 %v1469, %v1445
  %v1471 = vadd.f32 %v1470, %v1446
  %v1472 = vadd.f32 %v1471, %v1447
  %v1473 = vadd.f32 %v1472, %v1448
  %v1474 = vadd.f32 %v1473, %v1449
  %v1475 = vadd.f32 %v1474, %v1450
  %v1476 = vadd.f32 %v1475, %v1451
  %v1477 = vadd.f32 %v1476, %v1452
  %v1478 = vadd.f32 %v1477, %v1453
  %v1479 = vadd.f32 %v1478, %v1454
  %v1480 = vadd.f32 %v1479, %v1455
  %v1481 = vadd.f32 %v1480, %v1456
  %v1482 = vadd.f32 %v1481, %v1457
  %v1483 = vadd.f32 %v1482, %v1458
  %v1484 = vadd.f32 %v1483, %v1459
  %v1485 = vadd.f32 %v1484, %v1460
  %v1486 = vrot.slane %v1485, 4
  %v1487 = vadd.f32 %v1485, %v1486
  %v1488 = vrot.slane %v1487, 2
  %v1489 = vadd.f32 %v1487, %v1488
  %v1490 = vrot.slane %v1489, 1
  %v1491 = vadd.f32 %v1489, %v1490
  %v1492 = vmul.f32 %v1491, 0.0049261083
  %v1493 = vmul.f32 %v1435, %v1435
  %v1494 = vmul.f32 %v1436, %v1436
  %v1495 = vmul.f32 %v1437, %v1437
  %v1496 = vmul.f32 %v1438, %v1438
  %v1497 = vmul.f32 %v1439, %v1439
  %v1498 = vmul.f32 %v1440, %v1440
  %v1499 = vmul.f32 %v1441, %v1441
  %v1500 = vmul.f32 %v1442, %v1442
  %v1501 = vmul.f32 %v1443, %v1443
  %v1502 = vmul.f32 %v1444, %v1444
  %v1503 = vmul.f32 %v1445, %v1445
  %v1504 = vmul.f32 %v1446, %v1446
  %v1505 = vmul.f32 %v1447, %v1447
  %v1506 = vmul.f32 %v1448, %v1448
  %v1507 = vmul.f32 %v1449, %v1449
  %v1508 = vmul.f32 %v1450, %v1450
  %v1509 = vmul.f32 %v1451, %v1451
  %v1510 = vmul.f32 %v1452, %v1452
  %v1511 = vmul.f32 %v1453, %v1453
  %v1512 = vmul.f32 %v1454, %v1454
  %v1513 = vmul.f32 %v1455, %v1455
  %v1514 = vmul.f32 %v1456, %v1456
  %v1515 = vmul.f32 %v1457, %v1457
  %v1516 = vmul.f32 %v1458, %v1458
  %v1517 = vmul.f32 %v1459, %v1459
  %v1518 = vmul.f32 %v1460, %v1460
  %v1519 = vadd.f32 %v1493, %v1494
  %v1520 = vadd.f32 %v1519, %v1495
  %v1521 = vadd.f32 %v1520, %v1496
  %v1522 = vadd.f32 %v1521, %v1497
  %v1523 = vadd.f32 %v1522, %v1498
  %v1524 = vadd.f32 %v1523, %v1499
  %v1525 = vadd.f32 %v1524, %v1500
  %v1526 = vadd.f32 %v1525, %v1501
  %v1527 = vadd.f32 %v1526, %v1502
  %v1528 = vadd.f32 %v1527, %v1503
  %v1529 = vadd.f32 %v1528, %v1504
  %v1530 = vadd.f32 %v1529, %v1505
  %v1531 = vadd.f32 %v1530, %v1506
  %v1532 = vadd.f32 %v1531, %v1507
  %v1533 = vadd.f32 %v1532, %v1508
  %v1534 = vadd.f32 %v1533, %v1509
  %v1535 = vadd.f32 %v1534, %v1510
  %v1536 = vadd.f32 %v1535, %v1511
  %v1537 = vadd.f32 %v1536, %v1512
  %v1538 = vadd.f32 %v1537, %v1513
  %v1539 = vadd.f32 %v1538, %v1514
  %v1540 = vadd.f32 %v1539, %v1515
  %v1541 = vadd.f32 %v1540, %v1516
  %v1542 = vadd.f32 %v1541, %v1517
  %v1543 = vadd.f32 %v1542, %v1518
  %v1544 = vrot.slane %v1543, 4
  %v1545 = vadd.f32 %v1543, %v1544
  %v1546 = vrot.slane %v1545, 2
  %v1547 = vadd.f32 %v1545, %v1546
  %v1548 = vrot.slane %v1547, 1
  %v1549 = vadd.f32 %v1547, %v1548
  %v1550 = vmul.f32 %v1549, 0.0049261083
  %v1551 = vmul.f32 %v1492, %v1492
  %v1552 = vsub.f32 %v1550, %v1551
  %v1553 = vmax.f32 %v1552, 0.0
  %v1554 = vld [vmem:[%s11] sm:$0x1]
  %v1555 = vadd.f32 %v1553, 1e-05
  %v1556 = vrsqrt.pop %v1555
  %v1557 = vmul.f32 %v1554, %v1556
  %v1558 = vld [vmem:[%s12] sm:$0x1]
  %v1559 = vmul.f32 %v1492, %v1557
  %v1560 = vsub.f32 %v1558, %v1559
  %v1562 = vlaneseq
  %v1563 = vshrl.u32 %v1562, 7
  %v1564 = vsub.s32 0, %v1563
  %v1565 = vrot.slane %v1557, %v1564
  %v1567 = vmul.f32 %v1333, %v1565
  %v1568 = vmul.f32 %v1336, %v1565
  %v1569 = vmul.f32 %v1341, %v1565
  %v1570 = vmul.f32 %v1344, %v1565
  %v1571 = vmul.f32 %v1349, %v1565
  %v1572 = vmul.f32 %v1352, %v1565
  %v1573 = vmul.f32 %v1357, %v1565
  %v1574 = vmul.f32 %v1360, %v1565
  %v1575 = vmul.f32 %v1365, %v1565
  %v1576 = vmul.f32 %v1368, %v1565
  %v1577 = vmul.f32 %v1373, %v1565
  %v1578 = vmul.f32 %v1376, %v1565
  %v1579 = vmul.f32 %v1381, %v1565
  %v1580 = vmul.f32 %v1384, %v1565
  %v1581 = vmul.f32 %v1389, %v1565
  %v1582 = vmul.f32 %v1392, %v1565
  %v1583 = vmul.f32 %v1397, %v1565
  %v1584 = vmul.f32 %v1400, %v1565
  %v1585 = vmul.f32 %v1405, %v1565
  %v1586 = vmul.f32 %v1408, %v1565
  %v1587 = vmul.f32 %v1413, %v1565
  %v1588 = vmul.f32 %v1416, %v1565
  %v1589 = vmul.f32 %v1421, %v1565
  %v1590 = vmul.f32 %v1424, %v1565
  %v1591 = vmul.f32 %v1429, %v1565
  %v1592 = vmul.f32 %v1432, %v1565
  %v1594 = vlaneseq
  %v1595 = vshrl.u32 %v1594, 7
  %v1596 = vsub.s32 0, %v1595
  %v1597 = vrot.slane %v1560, %v1596
  %v1599 = vadd.f32 %v1567, %v1597
  %v1600 = vadd.f32 %v1568, %v1597
  %v1601 = vadd.f32 %v1569, %v1597
  %v1602 = vadd.f32 %v1570, %v1597
  %v1603 = vadd.f32 %v1571, %v1597
  %v1604 = vadd.f32 %v1572, %v1597
  %v1605 = vadd.f32 %v1573, %v1597
  %v1606 = vadd.f32 %v1574, %v1597
  %v1607 = vadd.f32 %v1575, %v1597
  %v1608 = vadd.f32 %v1576, %v1597
  %v1609 = vadd.f32 %v1577, %v1597
  %v1610 = vadd.f32 %v1578, %v1597
  %v1611 = vadd.f32 %v1579, %v1597
  %v1612 = vadd.f32 %v1580, %v1597
  %v1613 = vadd.f32 %v1581, %v1597
  %v1614 = vadd.f32 %v1582, %v1597
  %v1615 = vadd.f32 %v1583, %v1597
  %v1616 = vadd.f32 %v1584, %v1597
  %v1617 = vadd.f32 %v1585, %v1597
  %v1618 = vadd.f32 %v1586, %v1597
  %v1619 = vadd.f32 %v1587, %v1597
  %v1620 = vadd.f32 %v1588, %v1597
  %v1621 = vadd.f32 %v1589, %v1597
  %v1622 = vadd.f32 %v1590, %v1597
  %v1623 = vadd.f32 %v1591, %v1597
  %v1624 = vadd.f32 %v1592, %v1597
  %v1625 = vadd.f32 %v45, %v1599
  %v1626 = vadd.f32 %v46, %v1600
  %v1627 = vadd.f32 %v47, %v1601
  %v1628 = vadd.f32 %v48, %v1602
  %v1629 = vadd.f32 %v49, %v1603
  %v1630 = vadd.f32 %v50, %v1604
  %v1631 = vadd.f32 %v51, %v1605
  %v1632 = vadd.f32 %v52, %v1606
  %v1633 = vadd.f32 %v53, %v1607
  %v1634 = vadd.f32 %v54, %v1608
  %v1635 = vadd.f32 %v55, %v1609
  %v1636 = vadd.f32 %v56, %v1610
  %v1637 = vadd.f32 %v57, %v1611
  %v1638 = vadd.f32 %v58, %v1612
  %v1639 = vadd.f32 %v59, %v1613
  %v1640 = vadd.f32 %v60, %v1614
  %v1641 = vadd.f32 %v61, %v1615
  %v1642 = vadd.f32 %v62, %v1616
  %v1643 = vadd.f32 %v63, %v1617
  %v1644 = vadd.f32 %v64, %v1618
  %v1645 = vadd.f32 %v65, %v1619
  %v1646 = vadd.f32 %v66, %v1620
  %v1647 = vadd.f32 %v67, %v1621
  %v1648 = vadd.f32 %v68, %v1622
  %v1649 = vadd.f32 %v69, %v1623
  %v1650 = vadd.f32 %v70, %v1624
  %1651 = vst [vmem:[%s13] sm:$0xff] %v1625
  %1652 = vst [vmem:[%s13 + $0x8] sm:$0xff] %v1626
  %1653 = vst [vmem:[%s13 + $0x10] sm:$0xff] %v1627
  %1654 = vst [vmem:[%s13 + $0x18] sm:$0xff] %v1628
  %1655 = vst [vmem:[%s13 + $0x20] sm:$0xff] %v1629
  %1656 = vst [vmem:[%s13 + $0x28] sm:$0xff] %v1630
  %1657 = vst [vmem:[%s13 + $0x30] sm:$0xff] %v1631
  %1658 = vst [vmem:[%s13 + $0x38] sm:$0xff] %v1632
  %1659 = vst [vmem:[%s13 + $0x40] sm:$0xff] %v1633
  %1660 = vst [vmem:[%s13 + $0x48] sm:$0xff] %v1634
  %1661 = vst [vmem:[%s13 + $0x50] sm:$0xff] %v1635
  %1662 = vst [vmem:[%s13 + $0x58] sm:$0xff] %v1636
  %1663 = vst [vmem:[%s13 + $0x60] sm:$0xff] %v1637
  %1664 = vst [vmem:[%s13 + $0x68] sm:$0xff] %v1638
  %1665 = vst [vmem:[%s13 + $0x70] sm:$0xff] %v1639
  %1666 = vst [vmem:[%s13 + $0x78] sm:$0xff] %v1640
  %1667 = vst [vmem:[%s13 + $0x80] sm:$0xff] %v1641
  %1668 = vst [vmem:[%s13 + $0x88] sm:$0xff] %v1642
  %1669 = vst [vmem:[%s13 + $0x90] sm:$0xff] %v1643
  %1670 = vst [vmem:[%s13 + $0x98] sm:$0xff] %v1644
  %1671 = vst [vmem:[%s13 + $0xa0] sm:$0xff] %v1645
  %1672 = vst [vmem:[%s13 + $0xa8] sm:$0xff] %v1646
  %1673 = vst [vmem:[%s13 + $0xb0] sm:$0xff] %v1647
  %1674 = vst [vmem:[%s13 + $0xb8] sm:$0xff] %v1648
  %1675 = vst [vmem:[%s13 + $0xc0] sm:$0xff] %v1649
  %1676 = vst [vmem:[%s13 + $0xc8] sm:$0xff] %v1650
  // Predicated region
  $region54: #{conditional_logsig_forward.1} parent=0 // pred_check
    _
  $region55: #{conditional_logsig_forward.1} parent=0 // pred_check_branch
    %1678 = sbr.rel (0) target = $region57
  $region56: #{conditional_logsig_forward.1} parent=0 // pred_region
    _
  $region57: #{conditional_logsig_forward.1} parent=0 // pred_fallthru
    _
  // Predicated region
  $region58: #{conditional_logsig_forward.1} parent=0 // pred_check
    _
  $region59: #{conditional_logsig_forward.1} parent=0 // pred_check_branch
    %1680 = sbr.rel (0) target = $region61
  $region60: #{conditional_logsig_forward.1} parent=0 // pred_region
    _
  $region61: #{conditional_logsig_forward.1} parent=0 // pred_fallthru
    _

</llo_original>
